<compile_context>
chip_gen: v5e
topology: v5e:2x2
jax: 0.10.0
libtpu: 0.0.40
codegen_flags: <defaults>
</compile_context>

<pallas_src>
import functools

import numpy as np
import jax
import jax.numpy as jnp
from jax.experimental import pallas as pl
from jax.experimental.pallas import tpu as pltpu


# --------------------------- Pallas kernel -----------------------------------

def _patch_gram_kernel(xs_ref, o_ref, *, kw, wout, g_rows, inv_b, scale, reduce_mean):
    # xs_ref: (1, G, D, W)  -- vertically-unfolded rows: xs[oi, ki*C+c, :] = x[c, oi+ki, :],
    #                          with D = kh*C zero-padded up to a sublane multiple.
    # o_ref:  (1, B8, B8)   -- padded Gram accumulator (B8 = kw*D), resident across the
    #                          "arbitrary" group axis (grid axis 1).
    k = pl.program_id(1)

    @pl.when(k == 0)
    def _init():
        o_ref[...] = jnp.zeros_like(o_ref)

    # Patch block for this group of G output rows: feature order (kj, ki*C+c) on sublanes,
    # (output-row-in-group, output-col) on lanes -> one lane-dense contraction with K = G*wout.
    # Every image row is sliced exactly kw times here, once per horizontal tap.
    p = jnp.concatenate(
        [jnp.concatenate([xs_ref[0, g, :, kj:kj + wout] for kj in range(kw)], axis=0)
         for g in range(g_rows)], axis=1)                      # (B8, G*wout) f32

    if reduce_mean:
        # Per-position mean over the *real* b features: zero-padded feature rows (and the
        # all-zero columns of a zero-padded last row group) contribute nothing to the sum, so
        # summing all B8 rows and scaling by 1/b is exact.  NOTE: padded feature rows become
        # -mean after this; that only pollutes Gram rows/cols which the wrapper gathers away,
        # so o_ref must never be consumed without that gather.
        p = p - jnp.sum(p, axis=0, keepdims=True) * inv_b

    # bf16 single-pass MXU matmul, f32 accumulation.  Precision is chosen explicitly here and
    # does not depend on any global jax matmul-precision config.
    pb = p.astype(jnp.bfloat16)
    o_ref[0] = o_ref[0] + jax.lax.dot_general(
        pb, pb, (((1,), (1,)), ((), ())), preferred_element_type=jnp.float32)

    @pl.when(k == pl.num_programs(1) - 1)
    def _finalize():
        o_ref[...] = o_ref[...] * scale


# --------------------------- wrapper ------------------------------------------

def extract_patches_style_gram(x, kernel_size=(7, 7), reduce_mean=True, target_k=512):
    """x: (N, C, H, W) float32 -> (N, (C*kh*kw)**2), matching the PyTorch module."""
    n, c, h, w = x.shape
    kh, kw = kernel_size
    hout, wout = h - kh + 1, w - kw + 1
    b = c * kh * kw                         # real feature count (torch's `b`)
    l = hout * wout                         # number of patch positions (torch's `c*d`, d=1)
    d_real = kh * c                         # vertically-unfolded channel count per kj tap
    d = ((d_real + 7) // 8) * 8             # ... zero-padded to a full sublane tile
    b8 = kw * d                             # padded feature count used inside the kernel

    # Group output rows so the MXU contraction depth K = g_rows*wout is lane-dense (~target_k).
    g_rows = max(1, min(hout, -(-target_k // wout)))
    n_groups = -(-hout // g_rows)
    hpad = n_groups * g_rows                # zero-padded row groups contribute exactly 0

    # Glue: fold the kh vertical taps into the channel axis (kh-x blow-up of the small input;
    # the 49x full unfold is never materialised in HBM), then zero-pad channels / rows.
    xs = jnp.stack([x[:, :, ki:ki + hout, :] for ki in range(kh)], axis=1)   # (n,kh,c,hout,w)
    xs = jnp.transpose(xs, (0, 3, 1, 2, 4)).reshape(n, hout, d_real, w)      # (n,hout,kh*c,w)
    xs = jnp.pad(xs, ((0, 0), (0, hpad - hout), (0, d - d_real), (0, 0)))

    kern = functools.partial(
        _patch_gram_kernel, kw=kw, wout=wout, g_rows=g_rows,
        inv_b=1.0 / float(b), scale=1.0 / float(b * l), reduce_mean=reduce_mean)

    g8 = pl.pallas_call(
        kern,
        grid=(n, n_groups),
        in_specs=[pl.BlockSpec((1, g_rows, d, w), lambda i, k: (i, k, 0, 0))],
        out_specs=pl.BlockSpec((1, b8, b8), lambda i, k: (i, 0, 0)),
        out_shape=jax.ShapeDtypeStruct((n, b8, b8), jnp.float32),
        compiler_params=pltpu.CompilerParams(
            dimension_semantics=("parallel", "arbitrary")),
    )(xs)

    # Gather the real features back into torch F.unfold order (feature = cc*(kh*kw) + ki*kw + kj);
    # kernel feature rows are ordered (kj, ki, c) as kj*d + ki*c + cc, with padded rows dropped.
    cc, ki, kj = jnp.meshgrid(jnp.arange(c), jnp.arange(kh), jnp.arange(kw), indexing="ij")
    idx = (kj * d + ki * c + cc).reshape(-1)
    g = g8[:, idx[:, None], idx[None, :]]                     # (N, B, B)
    return g.reshape(n, b * b)


# --------------------------- pure-JAX reference -------------------------------

def reference_forward(x, kernel_size=(7, 7), reduce_mean=True):
    n, c, h, w = x.shape
    kh, kw = kernel_size
    hout, wout = h - kh + 1, w - kw + 1
    cols = jnp.stack([x[:, :, ki:ki + hout, kj:kj + wout]
                      for ki in range(kh) for kj in range(kw)], axis=2)  # (n,c,kh*kw,ho,wo)
    feats = cols.reshape(n, c * kh * kw, hout * wout)                    # F.unfold layout
    if reduce_mean:
        feats = feats - feats.mean(axis=1, keepdims=True)
    gram = jnp.einsum("nbl,ncl->nbc", feats, feats,
                      precision=jax.lax.Precision.HIGHEST)
    return (gram / (c * kh * kw * hout * wout)).reshape(n, -1)


# --------------------------- main ----------------------------------------------

if __name__ == "__main__":
    key = jax.random.PRNGKey(0)
    x = jax.random.normal(key, (2, 3, 16, 16), jnp.float32)   # NCHW, like the PyTorch module

    fwd = jax.jit(functools.partial(extract_patches_style_gram,
                                    kernel_size=(7, 7), reduce_mean=True))
    out = jax.block_until_ready(fwd(x))

    ref = reference_forward(x)
    assert out.shape == (2, (3 * 7 * 7) ** 2), out.shape
    # Kernel uses bf16 MXU inputs with f32 accumulation; reference is HIGHEST-precision f32.
    np.testing.assert_allclose(np.asarray(out), np.asarray(ref), rtol=1e-2, atol=5e-5)
    print("KERNEL_OK")
</pallas_src>

<mosaic_0001>
module attributes {stable_mosaic.version = 11 : i64} {
  func.func @_patch_gram_kernel(%arg0: i32, %arg1: i32, %arg2: memref<1x10x24x16xf32, #tpu.memory_space<vmem>>, %arg3: memref<1x168x168xf32, #tpu.memory_space<vmem>>) attributes {dimension_semantics = [#tpu.dimension_semantics<parallel>, #tpu.dimension_semantics<arbitrary>], iteration_bounds = array<i64: 2, 1>, scalar_prefetch = 0 : i64, scratch_operands = 0 : i64, tpu.core_type = #tpu.core_type<tc>, window_params = [{transform_indices = @transform_0, window_bounds = array<i64: 1, 10, 24, 16>}, {transform_indices = @transform_1, window_bounds = array<i64: 1, 168, 168>}]} {
    %c0_i32 = arith.constant 0 : i32
    %0 = arith.cmpi eq, %arg1, %c0_i32 : i32
    %1 = arith.extui %0 : i1 to i32
    %c0_i32_0 = arith.constant 0 : i32
    %2 = arith.cmpi ne, %1, %c0_i32_0 : i32
    scf.if %2 {
      %cst_281 = arith.constant 0.000000e+00 : f32
      %171 = vector.broadcast %cst_281 : f32 to vector<1x168x168xf32>
      %c0_282 = arith.constant 0 : index
      %c0_283 = arith.constant 0 : index
      %c0_284 = arith.constant 0 : index
      %172 = vector.load %arg3[%c0_282, %c0_283, %c0_284] : memref<1x168x168xf32, #tpu.memory_space<vmem>>, vector<1x168x168xf32>
      tpu.vector_store %arg3[%c0_282, %c0_283, %c0_284], %171 {strides = array<i32>} : memref<1x168x168xf32, #tpu.memory_space<vmem>>, vector<1x168x168xf32>,
    } else {
    }
    %c0 = arith.constant 0 : index
    %c0_1 = arith.constant 0 : index
    %c0_2 = arith.constant 0 : index
    %c0_3 = arith.constant 0 : index
    %3 = vector.load %arg2[%c0, %c0_1, %c0_2, %c0_3] : memref<1x10x24x16xf32, #tpu.memory_space<vmem>>, vector<1x1x24x10xf32>
    %4 = vector.shape_cast %3 : vector<1x1x24x10xf32> to vector<24x10xf32>
    %c0_4 = arith.constant 0 : index
    %c0_5 = arith.constant 0 : index
    %c0_6 = arith.constant 0 : index
    %c1 = arith.constant 1 : index
    %5 = vector.load %arg2[%c0_4, %c0_5, %c0_6, %c1] : memref<1x10x24x16xf32, #tpu.memory_space<vmem>>, vector<1x1x24x10xf32>
    %6 = vector.shape_cast %5 : vector<1x1x24x10xf32> to vector<24x10xf32>
    %c0_7 = arith.constant 0 : index
    %c0_8 = arith.constant 0 : index
    %c0_9 = arith.constant 0 : index
    %c2 = arith.constant 2 : index
    %7 = vector.load %arg2[%c0_7, %c0_8, %c0_9, %c2] : memref<1x10x24x16xf32, #tpu.memory_space<vmem>>, vector<1x1x24x10xf32>
    %8 = vector.shape_cast %7 : vector<1x1x24x10xf32> to vector<24x10xf32>
    %c0_10 = arith.constant 0 : index
    %c0_11 = arith.constant 0 : index
    %c0_12 = arith.constant 0 : index
    %c3 = arith.constant 3 : index
    %9 = vector.load %arg2[%c0_10, %c0_11, %c0_12, %c3] : memref<1x10x24x16xf32, #tpu.memory_space<vmem>>, vector<1x1x24x10xf32>
    %10 = vector.shape_cast %9 : vector<1x1x24x10xf32> to vector<24x10xf32>
    %c0_13 = arith.constant 0 : index
    %c0_14 = arith.constant 0 : index
    %c0_15 = arith.constant 0 : index
    %c4 = arith.constant 4 : index
    %11 = vector.load %arg2[%c0_13, %c0_14, %c0_15, %c4] : memref<1x10x24x16xf32, #tpu.memory_space<vmem>>, vector<1x1x24x10xf32>
    %12 = vector.shape_cast %11 : vector<1x1x24x10xf32> to vector<24x10xf32>
    %c0_16 = arith.constant 0 : index
    %c0_17 = arith.constant 0 : index
    %c0_18 = arith.constant 0 : index
    %c5 = arith.constant 5 : index
    %13 = vector.load %arg2[%c0_16, %c0_17, %c0_18, %c5] : memref<1x10x24x16xf32, #tpu.memory_space<vmem>>, vector<1x1x24x10xf32>
    %14 = vector.shape_cast %13 : vector<1x1x24x10xf32> to vector<24x10xf32>
    %c0_19 = arith.constant 0 : index
    %c0_20 = arith.constant 0 : index
    %c0_21 = arith.constant 0 : index
    %c6 = arith.constant 6 : index
    %15 = vector.load %arg2[%c0_19, %c0_20, %c0_21, %c6] : memref<1x10x24x16xf32, #tpu.memory_space<vmem>>, vector<1x1x24x10xf32>
    %16 = vector.shape_cast %15 : vector<1x1x24x10xf32> to vector<24x10xf32>
    %17 = tpu.concatenate %4, %6, %8, %10, %12, %14, %16 in 0 : vector<24x10xf32>, vector<24x10xf32>, vector<24x10xf32>, vector<24x10xf32>, vector<24x10xf32>, vector<24x10xf32>, vector<24x10xf32> -> vector<168x10xf32>
    %c0_22 = arith.constant 0 : index
    %c1_23 = arith.constant 1 : index
    %c0_24 = arith.constant 0 : index
    %c0_25 = arith.constant 0 : index
    %18 = vector.load %arg2[%c0_22, %c1_23, %c0_24, %c0_25] : memref<1x10x24x16xf32, #tpu.memory_space<vmem>>, vector<1x1x24x10xf32>
    %19 = vector.shape_cast %18 : vector<1x1x24x10xf32> to vector<24x10xf32>
    %c0_26 = arith.constant 0 : index
    %c1_27 = arith.constant 1 : index
    %c0_28 = arith.constant 0 : index
    %c1_29 = arith.constant 1 : index
    %20 = vector.load %arg2[%c0_26, %c1_27, %c0_28, %c1_29] : memref<1x10x24x16xf32, #tpu.memory_space<vmem>>, vector<1x1x24x10xf32>
    %21 = vector.shape_cast %20 : vector<1x1x24x10xf32> to vector<24x10xf32>
    %c0_30 = arith.constant 0 : index
    %c1_31 = arith.constant 1 : index
    %c0_32 = arith.constant 0 : index
    %c2_33 = arith.constant 2 : index
    %22 = vector.load %arg2[%c0_30, %c1_31, %c0_32, %c2_33] : memref<1x10x24x16xf32, #tpu.memory_space<vmem>>, vector<1x1x24x10xf32>
    %23 = vector.shape_cast %22 : vector<1x1x24x10xf32> to vector<24x10xf32>
    %c0_34 = arith.constant 0 : index
    %c1_35 = arith.constant 1 : index
    %c0_36 = arith.constant 0 : index
    %c3_37 = arith.constant 3 : index
    %24 = vector.load %arg2[%c0_34, %c1_35, %c0_36, %c3_37] : memref<1x10x24x16xf32, #tpu.memory_space<vmem>>, vector<1x1x24x10xf32>
    %25 = vector.shape_cast %24 : vector<1x1x24x10xf32> to vector<24x10xf32>
    %c0_38 = arith.constant 0 : index
    %c1_39 = arith.constant 1 : index
    %c0_40 = arith.constant 0 : index
    %c4_41 = arith.constant 4 : index
    %26 = vector.load %arg2[%c0_38, %c1_39, %c0_40, %c4_41] : memref<1x10x24x16xf32, #tpu.memory_space<vmem>>, vector<1x1x24x10xf32>
    %27 = vector.shape_cast %26 : vector<1x1x24x10xf32> to vector<24x10xf32>
    %c0_42 = arith.constant 0 : index
    %c1_43 = arith.constant 1 : index
    %c0_44 = arith.constant 0 : index
    %c5_45 = arith.constant 5 : index
    %28 = vector.load %arg2[%c0_42, %c1_43, %c0_44, %c5_45] : memref<1x10x24x16xf32, #tpu.memory_space<vmem>>, vector<1x1x24x10xf32>
    %29 = vector.shape_cast %28 : vector<1x1x24x10xf32> to vector<24x10xf32>
    %c0_46 = arith.constant 0 : index
    %c1_47 = arith.constant 1 : index
    %c0_48 = arith.constant 0 : index
    %c6_49 = arith.constant 6 : index
    %30 = vector.load %arg2[%c0_46, %c1_47, %c0_48, %c6_49] : memref<1x10x24x16xf32, #tpu.memory_space<vmem>>, vector<1x1x24x10xf32>
    %31 = vector.shape_cast %30 : vector<1x1x24x10xf32> to vector<24x10xf32>
    %32 = tpu.concatenate %19, %21, %23, %25, %27, %29, %31 in 0 : vector<24x10xf32>, vector<24x10xf32>, vector<24x10xf32>, vector<24x10xf32>, vector<24x10xf32>, vector<24x10xf32>, vector<24x10xf32> -> vector<168x10xf32>
    %c0_50 = arith.constant 0 : index
    %c2_51 = arith.constant 2 : index
    %c0_52 = arith.constant 0 : index
    %c0_53 = arith.constant 0 : index
    %33 = vector.load %arg2[%c0_50, %c2_51, %c0_52, %c0_53] : memref<1x10x24x16xf32, #tpu.memory_space<vmem>>, vector<1x1x24x10xf32>
    %34 = vector.shape_cast %33 : vector<1x1x24x10xf32> to vector<24x10xf32>
    %c0_54 = arith.constant 0 : index
    %c2_55 = arith.constant 2 : index
    %c0_56 = arith.constant 0 : index
    %c1_57 = arith.constant 1 : index
    %35 = vector.load %arg2[%c0_54, %c2_55, %c0_56, %c1_57] : memref<1x10x24x16xf32, #tpu.memory_space<vmem>>, vector<1x1x24x10xf32>
    %36 = vector.shape_cast %35 : vector<1x1x24x10xf32> to vector<24x10xf32>
    %c0_58 = arith.constant 0 : index
    %c2_59 = arith.constant 2 : index
    %c0_60 = arith.constant 0 : index
    %c2_61 = arith.constant 2 : index
    %37 = vector.load %arg2[%c0_58, %c2_59, %c0_60, %c2_61] : memref<1x10x24x16xf32, #tpu.memory_space<vmem>>, vector<1x1x24x10xf32>
    %38 = vector.shape_cast %37 : vector<1x1x24x10xf32> to vector<24x10xf32>
    %c0_62 = arith.constant 0 : index
    %c2_63 = arith.constant 2 : index
    %c0_64 = arith.constant 0 : index
    %c3_65 = arith.constant 3 : index
    %39 = vector.load %arg2[%c0_62, %c2_63, %c0_64, %c3_65] : memref<1x10x24x16xf32, #tpu.memory_space<vmem>>, vector<1x1x24x10xf32>
    %40 = vector.shape_cast %39 : vector<1x1x24x10xf32> to vector<24x10xf32>
    %c0_66 = arith.constant 0 : index
    %c2_67 = arith.constant 2 : index
    %c0_68 = arith.constant 0 : index
    %c4_69 = arith.constant 4 : index
    %41 = vector.load %arg2[%c0_66, %c2_67, %c0_68, %c4_69] : memref<1x10x24x16xf32, #tpu.memory_space<vmem>>, vector<1x1x24x10xf32>
    %42 = vector.shape_cast %41 : vector<1x1x24x10xf32> to vector<24x10xf32>
    %c0_70 = arith.constant 0 : index
    %c2_71 = arith.constant 2 : index
    %c0_72 = arith.constant 0 : index
    %c5_73 = arith.constant 5 : index
    %43 = vector.load %arg2[%c0_70, %c2_71, %c0_72, %c5_73] : memref<1x10x24x16xf32, #tpu.memory_space<vmem>>, vector<1x1x24x10xf32>
    %44 = vector.shape_cast %43 : vector<1x1x24x10xf32> to vector<24x10xf32>
    %c0_74 = arith.constant 0 : index
    %c2_75 = arith.constant 2 : index
    %c0_76 = arith.constant 0 : index
    %c6_77 = arith.constant 6 : index
    %45 = vector.load %arg2[%c0_74, %c2_75, %c0_76, %c6_77] : memref<1x10x24x16xf32, #tpu.memory_space<vmem>>, vector<1x1x24x10xf32>
    %46 = vector.shape_cast %45 : vector<1x1x24x10xf32> to vector<24x10xf32>
    %47 = tpu.concatenate %34, %36, %38, %40, %42, %44, %46 in 0 : vector<24x10xf32>, vector<24x10xf32>, vector<24x10xf32>, vector<24x10xf32>, vector<24x10xf32>, vector<24x10xf32>, vector<24x10xf32> -> vector<168x10xf32>
    %c0_78 = arith.constant 0 : index
    %c3_79 = arith.constant 3 : index
    %c0_80 = arith.constant 0 : index
    %c0_81 = arith.constant 0 : index
    %48 = vector.load %arg2[%c0_78, %c3_79, %c0_80, %c0_81] : memref<1x10x24x16xf32, #tpu.memory_space<vmem>>, vector<1x1x24x10xf32>
    %49 = vector.shape_cast %48 : vector<1x1x24x10xf32> to vector<24x10xf32>
    %c0_82 = arith.constant 0 : index
    %c3_83 = arith.constant 3 : index
    %c0_84 = arith.constant 0 : index
    %c1_85 = arith.constant 1 : index
    %50 = vector.load %arg2[%c0_82, %c3_83, %c0_84, %c1_85] : memref<1x10x24x16xf32, #tpu.memory_space<vmem>>, vector<1x1x24x10xf32>
    %51 = vector.shape_cast %50 : vector<1x1x24x10xf32> to vector<24x10xf32>
    %c0_86 = arith.constant 0 : index
    %c3_87 = arith.constant 3 : index
    %c0_88 = arith.constant 0 : index
    %c2_89 = arith.constant 2 : index
    %52 = vector.load %arg2[%c0_86, %c3_87, %c0_88, %c2_89] : memref<1x10x24x16xf32, #tpu.memory_space<vmem>>, vector<1x1x24x10xf32>
    %53 = vector.shape_cast %52 : vector<1x1x24x10xf32> to vector<24x10xf32>
    %c0_90 = arith.constant 0 : index
    %c3_91 = arith.constant 3 : index
    %c0_92 = arith.constant 0 : index
    %c3_93 = arith.constant 3 : index
    %54 = vector.load %arg2[%c0_90, %c3_91, %c0_92, %c3_93] : memref<1x10x24x16xf32, #tpu.memory_space<vmem>>, vector<1x1x24x10xf32>
    %55 = vector.shape_cast %54 : vector<1x1x24x10xf32> to vector<24x10xf32>
    %c0_94 = arith.constant 0 : index
    %c3_95 = arith.constant 3 : index
    %c0_96 = arith.constant 0 : index
    %c4_97 = arith.constant 4 : index
    %56 = vector.load %arg2[%c0_94, %c3_95, %c0_96, %c4_97] : memref<1x10x24x16xf32, #tpu.memory_space<vmem>>, vector<1x1x24x10xf32>
    %57 = vector.shape_cast %56 : vector<1x1x24x10xf32> to vector<24x10xf32>
    %c0_98 = arith.constant 0 : index
    %c3_99 = arith.constant 3 : index
    %c0_100 = arith.constant 0 : index
    %c5_101 = arith.constant 5 : index
    %58 = vector.load %arg2[%c0_98, %c3_99, %c0_100, %c5_101] : memref<1x10x24x16xf32, #tpu.memory_space<vmem>>, vector<1x1x24x10xf32>
    %59 = vector.shape_cast %58 : vector<1x1x24x10xf32> to vector<24x10xf32>
    %c0_102 = arith.constant 0 : index
    %c3_103 = arith.constant 3 : index
    %c0_104 = arith.constant 0 : index
    %c6_105 = arith.constant 6 : index
    %60 = vector.load %arg2[%c0_102, %c3_103, %c0_104, %c6_105] : memref<1x10x24x16xf32, #tpu.memory_space<vmem>>, vector<1x1x24x10xf32>
    %61 = vector.shape_cast %60 : vector<1x1x24x10xf32> to vector<24x10xf32>
    %62 = tpu.concatenate %49, %51, %53, %55, %57, %59, %61 in 0 : vector<24x10xf32>, vector<24x10xf32>, vector<24x10xf32>, vector<24x10xf32>, vector<24x10xf32>, vector<24x10xf32>, vector<24x10xf32> -> vector<168x10xf32>
    %c0_106 = arith.constant 0 : index
    %c4_107 = arith.constant 4 : index
    %c0_108 = arith.constant 0 : index
    %c0_109 = arith.constant 0 : index
    %63 = vector.load %arg2[%c0_106, %c4_107, %c0_108, %c0_109] : memref<1x10x24x16xf32, #tpu.memory_space<vmem>>, vector<1x1x24x10xf32>
    %64 = vector.shape_cast %63 : vector<1x1x24x10xf32> to vector<24x10xf32>
    %c0_110 = arith.constant 0 : index
    %c4_111 = arith.constant 4 : index
    %c0_112 = arith.constant 0 : index
    %c1_113 = arith.constant 1 : index
    %65 = vector.load %arg2[%c0_110, %c4_111, %c0_112, %c1_113] : memref<1x10x24x16xf32, #tpu.memory_space<vmem>>, vector<1x1x24x10xf32>
    %66 = vector.shape_cast %65 : vector<1x1x24x10xf32> to vector<24x10xf32>
    %c0_114 = arith.constant 0 : index
    %c4_115 = arith.constant 4 : index
    %c0_116 = arith.constant 0 : index
    %c2_117 = arith.constant 2 : index
    %67 = vector.load %arg2[%c0_114, %c4_115, %c0_116, %c2_117] : memref<1x10x24x16xf32, #tpu.memory_space<vmem>>, vector<1x1x24x10xf32>
    %68 = vector.shape_cast %67 : vector<1x1x24x10xf32> to vector<24x10xf32>
    %c0_118 = arith.constant 0 : index
    %c4_119 = arith.constant 4 : index
    %c0_120 = arith.constant 0 : index
    %c3_121 = arith.constant 3 : index
    %69 = vector.load %arg2[%c0_118, %c4_119, %c0_120, %c3_121] : memref<1x10x24x16xf32, #tpu.memory_space<vmem>>, vector<1x1x24x10xf32>
    %70 = vector.shape_cast %69 : vector<1x1x24x10xf32> to vector<24x10xf32>
    %c0_122 = arith.constant 0 : index
    %c4_123 = arith.constant 4 : index
    %c0_124 = arith.constant 0 : index
    %c4_125 = arith.constant 4 : index
    %71 = vector.load %arg2[%c0_122, %c4_123, %c0_124, %c4_125] : memref<1x10x24x16xf32, #tpu.memory_space<vmem>>, vector<1x1x24x10xf32>
    %72 = vector.shape_cast %71 : vector<1x1x24x10xf32> to vector<24x10xf32>
    %c0_126 = arith.constant 0 : index
    %c4_127 = arith.constant 4 : index
    %c0_128 = arith.constant 0 : index
    %c5_129 = arith.constant 5 : index
    %73 = vector.load %arg2[%c0_126, %c4_127, %c0_128, %c5_129] : memref<1x10x24x16xf32, #tpu.memory_space<vmem>>, vector<1x1x24x10xf32>
    %74 = vector.shape_cast %73 : vector<1x1x24x10xf32> to vector<24x10xf32>
    %c0_130 = arith.constant 0 : index
    %c4_131 = arith.constant 4 : index
    %c0_132 = arith.constant 0 : index
    %c6_133 = arith.constant 6 : index
    %75 = vector.load %arg2[%c0_130, %c4_131, %c0_132, %c6_133] : memref<1x10x24x16xf32, #tpu.memory_space<vmem>>, vector<1x1x24x10xf32>
    %76 = vector.shape_cast %75 : vector<1x1x24x10xf32> to vector<24x10xf32>
    %77 = tpu.concatenate %64, %66, %68, %70, %72, %74, %76 in 0 : vector<24x10xf32>, vector<24x10xf32>, vector<24x10xf32>, vector<24x10xf32>, vector<24x10xf32>, vector<24x10xf32>, vector<24x10xf32> -> vector<168x10xf32>
    %c0_134 = arith.constant 0 : index
    %c5_135 = arith.constant 5 : index
    %c0_136 = arith.constant 0 : index
    %c0_137 = arith.constant 0 : index
    %78 = vector.load %arg2[%c0_134, %c5_135, %c0_136, %c0_137] : memref<1x10x24x16xf32, #tpu.memory_space<vmem>>, vector<1x1x24x10xf32>
    %79 = vector.shape_cast %78 : vector<1x1x24x10xf32> to vector<24x10xf32>
    %c0_138 = arith.constant 0 : index
    %c5_139 = arith.constant 5 : index
    %c0_140 = arith.constant 0 : index
    %c1_141 = arith.constant 1 : index
    %80 = vector.load %arg2[%c0_138, %c5_139, %c0_140, %c1_141] : memref<1x10x24x16xf32, #tpu.memory_space<vmem>>, vector<1x1x24x10xf32>
    %81 = vector.shape_cast %80 : vector<1x1x24x10xf32> to vector<24x10xf32>
    %c0_142 = arith.constant 0 : index
    %c5_143 = arith.constant 5 : index
    %c0_144 = arith.constant 0 : index
    %c2_145 = arith.constant 2 : index
    %82 = vector.load %arg2[%c0_142, %c5_143, %c0_144, %c2_145] : memref<1x10x24x16xf32, #tpu.memory_space<vmem>>, vector<1x1x24x10xf32>
    %83 = vector.shape_cast %82 : vector<1x1x24x10xf32> to vector<24x10xf32>
    %c0_146 = arith.constant 0 : index
    %c5_147 = arith.constant 5 : index
    %c0_148 = arith.constant 0 : index
    %c3_149 = arith.constant 3 : index
    %84 = vector.load %arg2[%c0_146, %c5_147, %c0_148, %c3_149] : memref<1x10x24x16xf32, #tpu.memory_space<vmem>>, vector<1x1x24x10xf32>
    %85 = vector.shape_cast %84 : vector<1x1x24x10xf32> to vector<24x10xf32>
    %c0_150 = arith.constant 0 : index
    %c5_151 = arith.constant 5 : index
    %c0_152 = arith.constant 0 : index
    %c4_153 = arith.constant 4 : index
    %86 = vector.load %arg2[%c0_150, %c5_151, %c0_152, %c4_153] : memref<1x10x24x16xf32, #tpu.memory_space<vmem>>, vector<1x1x24x10xf32>
    %87 = vector.shape_cast %86 : vector<1x1x24x10xf32> to vector<24x10xf32>
    %c0_154 = arith.constant 0 : index
    %c5_155 = arith.constant 5 : index
    %c0_156 = arith.constant 0 : index
    %c5_157 = arith.constant 5 : index
    %88 = vector.load %arg2[%c0_154, %c5_155, %c0_156, %c5_157] : memref<1x10x24x16xf32, #tpu.memory_space<vmem>>, vector<1x1x24x10xf32>
    %89 = vector.shape_cast %88 : vector<1x1x24x10xf32> to vector<24x10xf32>
    %c0_158 = arith.constant 0 : index
    %c5_159 = arith.constant 5 : index
    %c0_160 = arith.constant 0 : index
    %c6_161 = arith.constant 6 : index
    %90 = vector.load %arg2[%c0_158, %c5_159, %c0_160, %c6_161] : memref<1x10x24x16xf32, #tpu.memory_space<vmem>>, vector<1x1x24x10xf32>
    %91 = vector.shape_cast %90 : vector<1x1x24x10xf32> to vector<24x10xf32>
    %92 = tpu.concatenate %79, %81, %83, %85, %87, %89, %91 in 0 : vector<24x10xf32>, vector<24x10xf32>, vector<24x10xf32>, vector<24x10xf32>, vector<24x10xf32>, vector<24x10xf32>, vector<24x10xf32> -> vector<168x10xf32>
    %c0_162 = arith.constant 0 : index
    %c6_163 = arith.constant 6 : index
    %c0_164 = arith.constant 0 : index
    %c0_165 = arith.constant 0 : index
    %93 = vector.load %arg2[%c0_162, %c6_163, %c0_164, %c0_165] : memref<1x10x24x16xf32, #tpu.memory_space<vmem>>, vector<1x1x24x10xf32>
    %94 = vector.shape_cast %93 : vector<1x1x24x10xf32> to vector<24x10xf32>
    %c0_166 = arith.constant 0 : index
    %c6_167 = arith.constant 6 : index
    %c0_168 = arith.constant 0 : index
    %c1_169 = arith.constant 1 : index
    %95 = vector.load %arg2[%c0_166, %c6_167, %c0_168, %c1_169] : memref<1x10x24x16xf32, #tpu.memory_space<vmem>>, vector<1x1x24x10xf32>
    %96 = vector.shape_cast %95 : vector<1x1x24x10xf32> to vector<24x10xf32>
    %c0_170 = arith.constant 0 : index
    %c6_171 = arith.constant 6 : index
    %c0_172 = arith.constant 0 : index
    %c2_173 = arith.constant 2 : index
    %97 = vector.load %arg2[%c0_170, %c6_171, %c0_172, %c2_173] : memref<1x10x24x16xf32, #tpu.memory_space<vmem>>, vector<1x1x24x10xf32>
    %98 = vector.shape_cast %97 : vector<1x1x24x10xf32> to vector<24x10xf32>
    %c0_174 = arith.constant 0 : index
    %c6_175 = arith.constant 6 : index
    %c0_176 = arith.constant 0 : index
    %c3_177 = arith.constant 3 : index
    %99 = vector.load %arg2[%c0_174, %c6_175, %c0_176, %c3_177] : memref<1x10x24x16xf32, #tpu.memory_space<vmem>>, vector<1x1x24x10xf32>
    %100 = vector.shape_cast %99 : vector<1x1x24x10xf32> to vector<24x10xf32>
    %c0_178 = arith.constant 0 : index
    %c6_179 = arith.constant 6 : index
    %c0_180 = arith.constant 0 : index
    %c4_181 = arith.constant 4 : index
    %101 = vector.load %arg2[%c0_178, %c6_179, %c0_180, %c4_181] : memref<1x10x24x16xf32, #tpu.memory_space<vmem>>, vector<1x1x24x10xf32>
    %102 = vector.shape_cast %101 : vector<1x1x24x10xf32> to vector<24x10xf32>
    %c0_182 = arith.constant 0 : index
    %c6_183 = arith.constant 6 : index
    %c0_184 = arith.constant 0 : index
    %c5_185 = arith.constant 5 : index
    %103 = vector.load %arg2[%c0_182, %c6_183, %c0_184, %c5_185] : memref<1x10x24x16xf32, #tpu.memory_space<vmem>>, vector<1x1x24x10xf32>
    %104 = vector.shape_cast %103 : vector<1x1x24x10xf32> to vector<24x10xf32>
    %c0_186 = arith.constant 0 : index
    %c6_187 = arith.constant 6 : index
    %c0_188 = arith.constant 0 : index
    %c6_189 = arith.constant 6 : index
    %105 = vector.load %arg2[%c0_186, %c6_187, %c0_188, %c6_189] : memref<1x10x24x16xf32, #tpu.memory_space<vmem>>, vector<1x1x24x10xf32>
    %106 = vector.shape_cast %105 : vector<1x1x24x10xf32> to vector<24x10xf32>
    %107 = tpu.concatenate %94, %96, %98, %100, %102, %104, %106 in 0 : vector<24x10xf32>, vector<24x10xf32>, vector<24x10xf32>, vector<24x10xf32>, vector<24x10xf32>, vector<24x10xf32>, vector<24x10xf32> -> vector<168x10xf32>
    %c0_190 = arith.constant 0 : index
    %c7 = arith.constant 7 : index
    %c0_191 = arith.constant 0 : index
    %c0_192 = arith.constant 0 : index
    %108 = vector.load %arg2[%c0_190, %c7, %c0_191, %c0_192] : memref<1x10x24x16xf32, #tpu.memory_space<vmem>>, vector<1x1x24x10xf32>
    %109 = vector.shape_cast %108 : vector<1x1x24x10xf32> to vector<24x10xf32>
    %c0_193 = arith.constant 0 : index
    %c7_194 = arith.constant 7 : index
    %c0_195 = arith.constant 0 : index
    %c1_196 = arith.constant 1 : index
    %110 = vector.load %arg2[%c0_193, %c7_194, %c0_195, %c1_196] : memref<1x10x24x16xf32, #tpu.memory_space<vmem>>, vector<1x1x24x10xf32>
    %111 = vector.shape_cast %110 : vector<1x1x24x10xf32> to vector<24x10xf32>
    %c0_197 = arith.constant 0 : index
    %c7_198 = arith.constant 7 : index
    %c0_199 = arith.constant 0 : index
    %c2_200 = arith.constant 2 : index
    %112 = vector.load %arg2[%c0_197, %c7_198, %c0_199, %c2_200] : memref<1x10x24x16xf32, #tpu.memory_space<vmem>>, vector<1x1x24x10xf32>
    %113 = vector.shape_cast %112 : vector<1x1x24x10xf32> to vector<24x10xf32>
    %c0_201 = arith.constant 0 : index
    %c7_202 = arith.constant 7 : index
    %c0_203 = arith.constant 0 : index
    %c3_204 = arith.constant 3 : index
    %114 = vector.load %arg2[%c0_201, %c7_202, %c0_203, %c3_204] : memref<1x10x24x16xf32, #tpu.memory_space<vmem>>, vector<1x1x24x10xf32>
    %115 = vector.shape_cast %114 : vector<1x1x24x10xf32> to vector<24x10xf32>
    %c0_205 = arith.constant 0 : index
    %c7_206 = arith.constant 7 : index
    %c0_207 = arith.constant 0 : index
    %c4_208 = arith.constant 4 : index
    %116 = vector.load %arg2[%c0_205, %c7_206, %c0_207, %c4_208] : memref<1x10x24x16xf32, #tpu.memory_space<vmem>>, vector<1x1x24x10xf32>
    %117 = vector.shape_cast %116 : vector<1x1x24x10xf32> to vector<24x10xf32>
    %c0_209 = arith.constant 0 : index
    %c7_210 = arith.constant 7 : index
    %c0_211 = arith.constant 0 : index
    %c5_212 = arith.constant 5 : index
    %118 = vector.load %arg2[%c0_209, %c7_210, %c0_211, %c5_212] : memref<1x10x24x16xf32, #tpu.memory_space<vmem>>, vector<1x1x24x10xf32>
    %119 = vector.shape_cast %118 : vector<1x1x24x10xf32> to vector<24x10xf32>
    %c0_213 = arith.constant 0 : index
    %c7_214 = arith.constant 7 : index
    %c0_215 = arith.constant 0 : index
    %c6_216 = arith.constant 6 : index
    %120 = vector.load %arg2[%c0_213, %c7_214, %c0_215, %c6_216] : memref<1x10x24x16xf32, #tpu.memory_space<vmem>>, vector<1x1x24x10xf32>
    %121 = vector.shape_cast %120 : vector<1x1x24x10xf32> to vector<24x10xf32>
    %122 = tpu.concatenate %109, %111, %113, %115, %117, %119, %121 in 0 : vector<24x10xf32>, vector<24x10xf32>, vector<24x10xf32>, vector<24x10xf32>, vector<24x10xf32>, vector<24x10xf32>, vector<24x10xf32> -> vector<168x10xf32>
    %c0_217 = arith.constant 0 : index
    %c8 = arith.constant 8 : index
    %c0_218 = arith.constant 0 : index
    %c0_219 = arith.constant 0 : index
    %123 = vector.load %arg2[%c0_217, %c8, %c0_218, %c0_219] : memref<1x10x24x16xf32, #tpu.memory_space<vmem>>, vector<1x1x24x10xf32>
    %124 = vector.shape_cast %123 : vector<1x1x24x10xf32> to vector<24x10xf32>
    %c0_220 = arith.constant 0 : index
    %c8_221 = arith.constant 8 : index
    %c0_222 = arith.constant 0 : index
    %c1_223 = arith.constant 1 : index
    %125 = vector.load %arg2[%c0_220, %c8_221, %c0_222, %c1_223] : memref<1x10x24x16xf32, #tpu.memory_space<vmem>>, vector<1x1x24x10xf32>
    %126 = vector.shape_cast %125 : vector<1x1x24x10xf32> to vector<24x10xf32>
    %c0_224 = arith.constant 0 : index
    %c8_225 = arith.constant 8 : index
    %c0_226 = arith.constant 0 : index
    %c2_227 = arith.constant 2 : index
    %127 = vector.load %arg2[%c0_224, %c8_225, %c0_226, %c2_227] : memref<1x10x24x16xf32, #tpu.memory_space<vmem>>, vector<1x1x24x10xf32>
    %128 = vector.shape_cast %127 : vector<1x1x24x10xf32> to vector<24x10xf32>
    %c0_228 = arith.constant 0 : index
    %c8_229 = arith.constant 8 : index
    %c0_230 = arith.constant 0 : index
    %c3_231 = arith.constant 3 : index
    %129 = vector.load %arg2[%c0_228, %c8_229, %c0_230, %c3_231] : memref<1x10x24x16xf32, #tpu.memory_space<vmem>>, vector<1x1x24x10xf32>
    %130 = vector.shape_cast %129 : vector<1x1x24x10xf32> to vector<24x10xf32>
    %c0_232 = arith.constant 0 : index
    %c8_233 = arith.constant 8 : index
    %c0_234 = arith.constant 0 : index
    %c4_235 = arith.constant 4 : index
    %131 = vector.load %arg2[%c0_232, %c8_233, %c0_234, %c4_235] : memref<1x10x24x16xf32, #tpu.memory_space<vmem>>, vector<1x1x24x10xf32>
    %132 = vector.shape_cast %131 : vector<1x1x24x10xf32> to vector<24x10xf32>
    %c0_236 = arith.constant 0 : index
    %c8_237 = arith.constant 8 : index
    %c0_238 = arith.constant 0 : index
    %c5_239 = arith.constant 5 : index
    %133 = vector.load %arg2[%c0_236, %c8_237, %c0_238, %c5_239] : memref<1x10x24x16xf32, #tpu.memory_space<vmem>>, vector<1x1x24x10xf32>
    %134 = vector.shape_cast %133 : vector<1x1x24x10xf32> to vector<24x10xf32>
    %c0_240 = arith.constant 0 : index
    %c8_241 = arith.constant 8 : index
    %c0_242 = arith.constant 0 : index
    %c6_243 = arith.constant 6 : index
    %135 = vector.load %arg2[%c0_240, %c8_241, %c0_242, %c6_243] : memref<1x10x24x16xf32, #tpu.memory_space<vmem>>, vector<1x1x24x10xf32>
    %136 = vector.shape_cast %135 : vector<1x1x24x10xf32> to vector<24x10xf32>
    %137 = tpu.concatenate %124, %126, %128, %130, %132, %134, %136 in 0 : vector<24x10xf32>, vector<24x10xf32>, vector<24x10xf32>, vector<24x10xf32>, vector<24x10xf32>, vector<24x10xf32>, vector<24x10xf32> -> vector<168x10xf32>
    %c0_244 = arith.constant 0 : index
    %c9 = arith.constant 9 : index
    %c0_245 = arith.constant 0 : index
    %c0_246 = arith.constant 0 : index
    %138 = vector.load %arg2[%c0_244, %c9, %c0_245, %c0_246] : memref<1x10x24x16xf32, #tpu.memory_space<vmem>>, vector<1x1x24x10xf32>
    %139 = vector.shape_cast %138 : vector<1x1x24x10xf32> to vector<24x10xf32>
    %c0_247 = arith.constant 0 : index
    %c9_248 = arith.constant 9 : index
    %c0_249 = arith.constant 0 : index
    %c1_250 = arith.constant 1 : index
    %140 = vector.load %arg2[%c0_247, %c9_248, %c0_249, %c1_250] : memref<1x10x24x16xf32, #tpu.memory_space<vmem>>, vector<1x1x24x10xf32>
    %141 = vector.shape_cast %140 : vector<1x1x24x10xf32> to vector<24x10xf32>
    %c0_251 = arith.constant 0 : index
    %c9_252 = arith.constant 9 : index
    %c0_253 = arith.constant 0 : index
    %c2_254 = arith.constant 2 : index
    %142 = vector.load %arg2[%c0_251, %c9_252, %c0_253, %c2_254] : memref<1x10x24x16xf32, #tpu.memory_space<vmem>>, vector<1x1x24x10xf32>
    %143 = vector.shape_cast %142 : vector<1x1x24x10xf32> to vector<24x10xf32>
    %c0_255 = arith.constant 0 : index
    %c9_256 = arith.constant 9 : index
    %c0_257 = arith.constant 0 : index
    %c3_258 = arith.constant 3 : index
    %144 = vector.load %arg2[%c0_255, %c9_256, %c0_257, %c3_258] : memref<1x10x24x16xf32, #tpu.memory_space<vmem>>, vector<1x1x24x10xf32>
    %145 = vector.shape_cast %144 : vector<1x1x24x10xf32> to vector<24x10xf32>
    %c0_259 = arith.constant 0 : index
    %c9_260 = arith.constant 9 : index
    %c0_261 = arith.constant 0 : index
    %c4_262 = arith.constant 4 : index
    %146 = vector.load %arg2[%c0_259, %c9_260, %c0_261, %c4_262] : memref<1x10x24x16xf32, #tpu.memory_space<vmem>>, vector<1x1x24x10xf32>
    %147 = vector.shape_cast %146 : vector<1x1x24x10xf32> to vector<24x10xf32>
    %c0_263 = arith.constant 0 : index
    %c9_264 = arith.constant 9 : index
    %c0_265 = arith.constant 0 : index
    %c5_266 = arith.constant 5 : index
    %148 = vector.load %arg2[%c0_263, %c9_264, %c0_265, %c5_266] : memref<1x10x24x16xf32, #tpu.memory_space<vmem>>, vector<1x1x24x10xf32>
    %149 = vector.shape_cast %148 : vector<1x1x24x10xf32> to vector<24x10xf32>
    %c0_267 = arith.constant 0 : index
    %c9_268 = arith.constant 9 : index
    %c0_269 = arith.constant 0 : index
    %c6_270 = arith.constant 6 : index
    %150 = vector.load %arg2[%c0_267, %c9_268, %c0_269, %c6_270] : memref<1x10x24x16xf32, #tpu.memory_space<vmem>>, vector<1x1x24x10xf32>
    %151 = vector.shape_cast %150 : vector<1x1x24x10xf32> to vector<24x10xf32>
    %152 = tpu.concatenate %139, %141, %143, %145, %147, %149, %151 in 0 : vector<24x10xf32>, vector<24x10xf32>, vector<24x10xf32>, vector<24x10xf32>, vector<24x10xf32>, vector<24x10xf32>, vector<24x10xf32> -> vector<168x10xf32>
    %153 = tpu.concatenate %17, %32, %47, %62, %77, %92, %107, %122, %137, %152 in 1 : vector<168x10xf32>, vector<168x10xf32>, vector<168x10xf32>, vector<168x10xf32>, vector<168x10xf32>, vector<168x10xf32>, vector<168x10xf32>, vector<168x10xf32>, vector<168x10xf32>, vector<168x10xf32> -> vector<168x100xf32>
    %cst = arith.constant dense<0.000000e+00> : vector<100xf32>
    %154 = vector.multi_reduction <add>, %153, %cst [0] : vector<168x100xf32> to vector<100xf32>
    %155 = vector.shape_cast %154 : vector<100xf32> to vector<1x100xf32>
    %cst_271 = arith.constant 0.00680272094 : f32
    %156 = vector.broadcast %cst_271 : f32 to vector<1x100xf32>
    %157 = arith.mulf %155, %156 : vector<1x100xf32>
    %158 = vector.broadcast %157 : vector<1x100xf32> to vector<168x100xf32>
    %159 = arith.subf %153, %158 : vector<168x100xf32>
    %160 = arith.truncf %159 : vector<168x100xf32> to vector<168x100xbf16>
    %c0_272 = arith.constant 0 : index
    %c0_273 = arith.constant 0 : index
    %c0_274 = arith.constant 0 : index
    %161 = vector.load %arg3[%c0_272, %c0_273, %c0_274] : memref<1x168x168xf32, #tpu.memory_space<vmem>>, vector<1x168x168xf32>
    %162 = vector.shape_cast %161 : vector<1x168x168xf32> to vector<168x168xf32>
    %cst_275 = arith.constant dense<0.000000e+00> : vector<168x168xf32>
    %163 = tpu.matmul %160, %160, %cst_275 {dimension_numbers = #tpu.dot_dimension_numbers<[1], [1], [0], [0], [0, 0, 1, 0], [], []>} : vector<168x100xbf16>, vector<168x100xbf16>, vector<168x168xf32> -> vector<168x168xf32>
    %164 = arith.addf %162, %163 : vector<168x168xf32>
    %c0_276 = arith.constant 0 : index
    %c0_277 = arith.constant 0 : index
    %c0_278 = arith.constant 0 : index
    %165 = vector.load %arg3[%c0_276, %c0_277, %c0_278] : memref<1x168x168xf32, #tpu.memory_space<vmem>>, vector<1x168x168xf32>
    %166 = vector.shape_cast %165 : vector<1x168x168xf32> to vector<168x168xf32>
    %167 = vector.shape_cast %164 : vector<168x168xf32> to vector<1x168x168xf32>
    tpu.vector_store %arg3[%c0_276, %c0_277, %c0_278], %167 {strides = array<i32>} : memref<1x168x168xf32, #tpu.memory_space<vmem>>, vector<1x168x168xf32>,
    %c0_i32_279 = arith.constant 0 : i32
    %168 = arith.cmpi eq, %arg1, %c0_i32_279 : i32
    %169 = arith.extui %168 : i1 to i32
    %c0_i32_280 = arith.constant 0 : i32
    %170 = arith.cmpi ne, %169, %c0_i32_280 : i32
    scf.if %170 {
      %c0_281 = arith.constant 0 : index
      %c0_282 = arith.constant 0 : index
      %c0_283 = arith.constant 0 : index
      %171 = vector.load %arg3[%c0_281, %c0_282, %c0_283] : memref<1x168x168xf32, #tpu.memory_space<vmem>>, vector<1x168x168xf32>
      %cst_284 = arith.constant 6.80272132E-5 : f32
      %172 = vector.broadcast %cst_284 : f32 to vector<1x168x168xf32>
      %173 = arith.mulf %171, %172 : vector<1x168x168xf32>
      %c0_285 = arith.constant 0 : index
      %c0_286 = arith.constant 0 : index
      %c0_287 = arith.constant 0 : index
      %174 = vector.load %arg3[%c0_285, %c0_286, %c0_287] : memref<1x168x168xf32, #tpu.memory_space<vmem>>, vector<1x168x168xf32>
      tpu.vector_store %arg3[%c0_285, %c0_286, %c0_287], %173 {strides = array<i32>} : memref<1x168x168xf32, #tpu.memory_space<vmem>>, vector<1x168x168xf32>,
    } else {
    }
    return
  }
  func.func @transform_0(%arg0: i32, %arg1: i32) -> (i32, i32, i32, i32) {
    %c0_i32 = arith.constant 0 : i32
    %c0_i32_0 = arith.constant 0 : i32
    %c0_i32_1 = arith.constant 0 : i32
    return %arg0, %arg1, %c0_i32, %c0_i32_0 : i32, i32, i32, i32
  }
  func.func @transform_1(%arg0: i32, %arg1: i32) -> (i32, i32, i32) {
    %c0_i32 = arith.constant 0 : i32
    %c0_i32_0 = arith.constant 0 : i32
    %c0_i32_1 = arith.constant 0 : i32
    return %arg0, %c0_i32, %c0_i32_0 : i32, i32, i32
  }
}

</mosaic_0001>

<llo_original>
// kernel: extract_patches_style_gram.1
$region0: #{extract_patches_style_gram.1}
  #allocation0 [shape = 'u32[]', space=smem, size = 0x4, offset = 0x4, fixed_abs, tag = 'smem constant byte address 0x4 - core index']
  #allocation1 [shape = 'u32[72,128]{1,0:T(1,128)}', space=vmem, size = 0x9000, scoped, tag = 'internal scratch']
  %s0 = inlined_call_operand.vmem [shape: f32[2,10,24,16], index: 0, kind: input, shape index: {}]
  %s1 = inlined_call_operand.vmem [shape: f32[2,168,168], index: 1, kind: output, shape index: {}]
  %s2 = sld [smem:[#allocation0]]
  $region45: #{extract_patches_style_gram.1} parent=0
    _
  %s4 = ssub.s32 1, %s2
  %s5 = scalar_select 0, %s4, %s2
  loop: start=0, step=1, limit=4
  $region2: #{extract_patches_style_gram.1} parent=0 // loop_pre_header
    _
  $region3: #{extract_patches_style_gram.1} parent=0 // loop_header
    %s7 = sphi 0, %s11
    %p8 = scmp.ge.s32.totalorder %s7, 4
    %s14 = sphi 0, %s26
    %s15 = sphi 0, %s22
    %s16 = sphi 0, %s14
    %s17 = sphi 0, %s15
    %s18 = sphi 0, %s16
    %s19 = sphi 0, %s17
    %s31 = sphi 0, %s33
    %s34 = sphi 0, %s31
    %s35 = sphi 0, %s34
    %s51 = sphi 0, %s35
    %s57 = sphi 0, %s59
    %s60 = sphi 0, %s57
    %s61 = sphi 0, %s60
    %s77 = sphi 0, %s61
  $region4: #{extract_patches_style_gram.1} parent=0 // loop_header_branch
    %10 = sbr.rel (%p8) target = $region8
  $region5: #{extract_patches_style_gram.1} parent=0 // loop_body
    %s12 = ssub.s32 %s7, 1
    %s13 = ssub.s32 %s7, 2
    %s20 = sadd.s32 1, %s15
    %p21 = scmp.ge.s32.totalorder %s20, 1
    %s22 = scalar_select %p21, 0, %s20
    %s23 = sadd.s32 1, %s14
    %s24 = scalar_select %p21, %s23, %s14
    %p25 = scmp.ge.s32.totalorder %s24, 2
    %s26 = scalar_select %p25, 0, %s24
    %s27 = ssub.s32 %s14, %s26
    %s28 = ssub.s32 %s15, %s22
    %s29 = sor.u32 %s27, %s28
    %p30 = scmp.eq.s32.totalorder %s29, 0
    %s32 = sadd.s32 %s31, 1
    %s33 = scalar_select %p30, %s31, %s32
    %p36 = pneg %p30
    %p37 = scmp.eq.s32.totalorder %s7, 1
    %p38 = por %p36, %p37
    %p39 = scmp.ne.s32.totalorder %s31, %s34
    %p40 = scmp.eq.s32.totalorder %s7, 0
    %p41 = por %p39, %p40
    %p42 = scmp.ne.s32.totalorder %s31, %s34
    %p43 = scmp.eq.s32.totalorder %s12, 1
    %p44 = por %p42, %p43
    %p45 = scmp.ne.s32.totalorder %s34, %s35
    %p46 = scmp.eq.s32.totalorder %s12, 0
    %p47 = por %p45, %p46
    %p48 = scmp.ne.s32.totalorder %s34, %s35
    %p49 = scmp.eq.s32.totalorder %s13, 1
    %p50 = por %p48, %p49
    %p52 = scmp.ne.s32.totalorder %s35, %s51
    %p53 = scmp.eq.s32.totalorder %s13, 0
    %p54 = por %p52, %p53
    %s55 = ssub.s32 %s14, %s26
    %p56 = scmp.eq.s32.totalorder %s55, 0
    %s58 = sadd.s32 %s57, 1
    %s59 = scalar_select %p56, %s57, %s58
    %p62 = pneg %p56
    %p63 = scmp.eq.s32.totalorder %s7, 1
    %p64 = por %p62, %p63
    %p65 = scmp.ne.s32.totalorder %s57, %s60
    %p66 = scmp.eq.s32.totalorder %s7, 0
    %p67 = por %p65, %p66
    %p68 = scmp.ne.s32.totalorder %s57, %s60
    %p69 = scmp.eq.s32.totalorder %s12, 1
    %p70 = por %p68, %p69
    %p71 = scmp.ne.s32.totalorder %s60, %s61
    %p72 = scmp.eq.s32.totalorder %s12, 0
    %p73 = por %p71, %p72
    %p74 = scmp.ne.s32.totalorder %s60, %s61
    %p75 = scmp.eq.s32.totalorder %s13, 1
    %p76 = por %p74, %p75
    %p78 = scmp.ne.s32.totalorder %s61, %s77
    %p79 = scmp.eq.s32.totalorder %s13, 0
    %p80 = por %p78, %p79
    %p81 = scmp.le.s32.totalorder 1, %s7
    %p82 = scmp.lt.s32.totalorder %s7, 3
    %p83 = pnand %p81, %p82
    %p84 = pneg %p83
    // Predicated region
    $region9: #{extract_patches_style_gram.1} parent=5 // pred_check
      _
    $region10: #{extract_patches_style_gram.1} parent=5 // pred_check_branch
      %86 = sbr.rel (%p83) target = $region12
    $region11: #{extract_patches_style_gram.1} parent=5 // pred_region
      %s87 = ssub.s32 %s7, 1
    $region12: #{extract_patches_style_gram.1} parent=5 // pred_fallthru
      _
    %p88 = scmp.lt.s32.totalorder %s7, 2
    // Predicated region
    $region13: #{extract_patches_style_gram.1} parent=5 // pred_check
      %p89 = pneg %p88
    $region14: #{extract_patches_style_gram.1} parent=5 // pred_check_branch
      %91 = sbr.rel (%p89) target = $region16
    $region15: #{extract_patches_style_gram.1} parent=5 // pred_region
      // Predicated region
      $region17: #{extract_patches_style_gram.1} parent=15 // pred_check
        %p92 = pneg %p41
      $region18: #{extract_patches_style_gram.1} parent=15 // pred_check_branch
        %94 = sbr.rel (%p92) target = $region20
      $region19: #{extract_patches_style_gram.1} parent=15 // pred_region
        %s95 = smul.u32 10, %s15
        %p96 = scmp.lt.s32.totalorder %s14, 1
        %s97 = scalar_select %p96, %s14, 1
        %p98 = scmp.lt.s32.totalorder %s95, 9
        %s99 = scalar_select %p98, %s95, 9
        %s100 = smul.addr %s99, 3
        %s101 = smul.addr %s97, 30
        %s102 = sadd.s32 %s100, %s101
        %s103 = smul.addr %s102, 8
        %s104 = scalar_lea.vmem %s0, %s103
        %s105 = smul.u32 10, %s15
      $region20: #{extract_patches_style_gram.1} parent=15 // pred_fallthru
        _
    $region16: #{extract_patches_style_gram.1} parent=5 // pred_fallthru
      _
    %p106 = scmp.le.s32.totalorder 1, %s7
    %p107 = scmp.lt.s32.totalorder %s7, 3
    %p108 = pnand %p106, %p107
    %p109 = pneg %p108
    // Predicated region
    $region21: #{extract_patches_style_gram.1} parent=5 // pred_check
      _
    $region22: #{extract_patches_style_gram.1} parent=5 // pred_check_branch
      %111 = sbr.rel (%p108) target = $region24
    $region23: #{extract_patches_style_gram.1} parent=5 // pred_region
      %s112 = ssub.s32 %s7, 1
      %s113 = smul.u32 10, %s17
      %p114 = scmp.lt.s32.totalorder %s16, 1
      %s115 = scalar_select %p114, %s16, 1
      %p116 = scmp.lt.s32.totalorder %s113, 9
      %s117 = scalar_select %p116, %s113, 9
      %s118 = smul.addr %s117, 3
      %s119 = smul.addr %s115, 30
      %s120 = sadd.s32 %s118, %s119
      %s121 = smul.addr %s120, 8
      %s122 = scalar_lea.vmem %s0, %s121
      %p123 = pneg %p47
      %p124 = pneg %p44
      %p125 = pneg %p73
      %p126 = pneg %p70
      %p127 = scmp.lt.s32.totalorder %s16, 1
      %s128 = scalar_select %p127, %s16, 1
      %s129 = smul.addr %s128, 42
      %s130 = smul.addr %s129, 8
      %s131 = scalar_lea.vmem %s1, %s130
      %s132 = smul.u32 10, %s17
      %p133 = scmp.lt.s32.totalorder %s16, 1
      %s134 = scalar_select %p133, %s16, 1
      %p135 = scmp.lt.s32.totalorder %s132, 9
      %s136 = scalar_select %p135, %s132, 9
      %s137 = smul.addr %s136, 3
      %s138 = smul.addr %s134, 30
      %s139 = sadd.s32 %s137, %s138
      %s140 = smul.addr %s139, 8
      %s141 = scalar_lea.vmem %s0, %s140
      %s142 = smul.u32 10, %s17
      %p143 = scmp.lt.s32.totalorder %s16, 1
      %s144 = scalar_select %p143, %s16, 1
      %s145 = smul.addr %s144, 42
      %s146 = smul.addr %s145, 8
      %s147 = scalar_lea.vmem %s1, %s146
      %p149 = scmp.eq.s32.totalorder %s17, 0
      // Predicated region
      $region25: #{extract_patches_style_gram.1} parent=23 // pred_check
        %p150 = pneg %p149
      $region26: #{extract_patches_style_gram.1} parent=23 // pred_check_branch
        %152 = sbr.rel (%p150) target = $region28
      $region27: #{extract_patches_style_gram.1} parent=23 // pred_region
        %153 = vst [vmem:[%s147] sm:$0xff] 0.0
        %vm154 = vcmask 326656
        %155 = vst.msk [vmem:[%s147 + $0x8] sm:$0xff] %vm154, 0.0
        %156 = vst [vmem:[%s147 + $0x10] sm:$0xff] 0.0
        %157 = vst.msk [vmem:[%s147 + $0x18] sm:$0xff] %vm154, 0.0
        %158 = vst [vmem:[%s147 + $0x20] sm:$0xff] 0.0
        %159 = vst.msk [vmem:[%s147 + $0x28] sm:$0xff] %vm154, 0.0
        %160 = vst [vmem:[%s147 + $0x30] sm:$0xff] 0.0
        %161 = vst.msk [vmem:[%s147 + $0x38] sm:$0xff] %vm154, 0.0
        %162 = vst [vmem:[%s147 + $0x40] sm:$0xff] 0.0
        %163 = vst.msk [vmem:[%s147 + $0x48] sm:$0xff] %vm154, 0.0
        %164 = vst [vmem:[%s147 + $0x50] sm:$0xff] 0.0
        %165 = vst.msk [vmem:[%s147 + $0x58] sm:$0xff] %vm154, 0.0
        %166 = vst [vmem:[%s147 + $0x60] sm:$0xff] 0.0
        %167 = vst.msk [vmem:[%s147 + $0x68] sm:$0xff] %vm154, 0.0
        %168 = vst [vmem:[%s147 + $0x70] sm:$0xff] 0.0
        %169 = vst.msk [vmem:[%s147 + $0x78] sm:$0xff] %vm154, 0.0
        %170 = vst [vmem:[%s147 + $0x80] sm:$0xff] 0.0
        %171 = vst.msk [vmem:[%s147 + $0x88] sm:$0xff] %vm154, 0.0
        %172 = vst [vmem:[%s147 + $0x90] sm:$0xff] 0.0
        %173 = vst.msk [vmem:[%s147 + $0x98] sm:$0xff] %vm154, 0.0
        %174 = vst [vmem:[%s147 + $0xa0] sm:$0xff] 0.0
        %175 = vst.msk [vmem:[%s147 + $0xa8] sm:$0xff] %vm154, 0.0
        %176 = vst [vmem:[%s147 + $0xb0] sm:$0xff] 0.0
        %177 = vst.msk [vmem:[%s147 + $0xb8] sm:$0xff] %vm154, 0.0
        %178 = vst [vmem:[%s147 + $0xc0] sm:$0xff] 0.0
        %179 = vst.msk [vmem:[%s147 + $0xc8] sm:$0xff] %vm154, 0.0
        %180 = vst [vmem:[%s147 + $0xd0] sm:$0xff] 0.0
        %181 = vst.msk [vmem:[%s147 + $0xd8] sm:$0xff] %vm154, 0.0
        %182 = vst [vmem:[%s147 + $0xe0] sm:$0xff] 0.0
        %183 = vst.msk [vmem:[%s147 + $0xe8] sm:$0xff] %vm154, 0.0
        %184 = vst [vmem:[%s147 + $0xf0] sm:$0xff] 0.0
        %185 = vst.msk [vmem:[%s147 + $0xf8] sm:$0xff] %vm154, 0.0
        %186 = vst [vmem:[%s147 + $0x100] sm:$0xff] 0.0
        %187 = vst.msk [vmem:[%s147 + $0x108] sm:$0xff] %vm154, 0.0
        %188 = vst [vmem:[%s147 + $0x110] sm:$0xff] 0.0
        %189 = vst.msk [vmem:[%s147 + $0x118] sm:$0xff] %vm154, 0.0
        %190 = vst [vmem:[%s147 + $0x120] sm:$0xff] 0.0
        %191 = vst.msk [vmem:[%s147 + $0x128] sm:$0xff] %vm154, 0.0
        %192 = vst [vmem:[%s147 + $0x130] sm:$0xff] 0.0
        %193 = vst.msk [vmem:[%s147 + $0x138] sm:$0xff] %vm154, 0.0
        %194 = vst [vmem:[%s147 + $0x140] sm:$0xff] 0.0
        %195 = vst.msk [vmem:[%s147 + $0x148] sm:$0xff] %vm154, 0.0
      $region28: #{extract_patches_style_gram.1} parent=23 // pred_fallthru
        _
      %v196 = vld [vmem:[%s141] sm:$0xff]
      %v197 = vld [vmem:[%s141 + $0x8] sm:$0xff]
      %v198 = vld [vmem:[%s141 + $0x10] sm:$0xff]
      %202 = vrot.lane.b32.xlu0 %v196, 127
      %v203 = vpop.permute.xlu0 %202
      %204 = vrot.lane.b32.xlu0 %v197, 127
      %v205 = vpop.permute.xlu0 %204
      %206 = vrot.lane.b32.xlu0 %v198, 127
      %v207 = vpop.permute.xlu0 %206
      %211 = vrot.lane.b32.xlu0 %v196, 126
      %v212 = vpop.permute.xlu0 %211
      %213 = vrot.lane.b32.xlu0 %v197, 126
      %v214 = vpop.permute.xlu0 %213
      %215 = vrot.lane.b32.xlu0 %v198, 126
      %v216 = vpop.permute.xlu0 %215
      %220 = vrot.lane.b32.xlu0 %v196, 125
      %v221 = vpop.permute.xlu0 %220
      %222 = vrot.lane.b32.xlu0 %v197, 125
      %v223 = vpop.permute.xlu0 %222
      %224 = vrot.lane.b32.xlu0 %v198, 125
      %v225 = vpop.permute.xlu0 %224
      %229 = vrot.lane.b32.xlu0 %v196, 124
      %v230 = vpop.permute.xlu0 %229
      %231 = vrot.lane.b32.xlu0 %v197, 124
      %v232 = vpop.permute.xlu0 %231
      %233 = vrot.lane.b32.xlu0 %v198, 124
      %v234 = vpop.permute.xlu0 %233
      %238 = vrot.lane.b32.xlu0 %v196, 123
      %v239 = vpop.permute.xlu0 %238
      %240 = vrot.lane.b32.xlu0 %v197, 123
      %v241 = vpop.permute.xlu0 %240
      %242 = vrot.lane.b32.xlu0 %v198, 123
      %v243 = vpop.permute.xlu0 %242
      %247 = vrot.lane.b32.xlu0 %v196, 122
      %v248 = vpop.permute.xlu0 %247
      %249 = vrot.lane.b32.xlu0 %v197, 122
      %v250 = vpop.permute.xlu0 %249
      %251 = vrot.lane.b32.xlu0 %v198, 122
      %v252 = vpop.permute.xlu0 %251
      %s256 = scalar_lea.vmem %s141, 24
      %v257 = vld [vmem:[%s256] sm:$0xff]
      %v258 = vld [vmem:[%s256 + $0x8] sm:$0xff]
      %v259 = vld [vmem:[%s256 + $0x10] sm:$0xff]
      %263 = vrot.lane.b32.xlu0 %v257, 127
      %v264 = vpop.permute.xlu0 %263
      %265 = vrot.lane.b32.xlu0 %v258, 127
      %v266 = vpop.permute.xlu0 %265
      %267 = vrot.lane.b32.xlu0 %v259, 127
      %v268 = vpop.permute.xlu0 %267
      %269 = vrot.lane.b32.xlu0 %v257, 126
      %v270 = vpop.permute.xlu0 %269
      %271 = vrot.lane.b32.xlu0 %v258, 126
      %v272 = vpop.permute.xlu0 %271
      %273 = vrot.lane.b32.xlu0 %v259, 126
      %v274 = vpop.permute.xlu0 %273
      %275 = vrot.lane.b32.xlu0 %v257, 125
      %v276 = vpop.permute.xlu0 %275
      %277 = vrot.lane.b32.xlu0 %v258, 125
      %v278 = vpop.permute.xlu0 %277
      %279 = vrot.lane.b32.xlu0 %v259, 125
      %v280 = vpop.permute.xlu0 %279
      %281 = vrot.lane.b32.xlu0 %v257, 124
      %v282 = vpop.permute.xlu0 %281
      %283 = vrot.lane.b32.xlu0 %v258, 124
      %v284 = vpop.permute.xlu0 %283
      %285 = vrot.lane.b32.xlu0 %v259, 124
      %v286 = vpop.permute.xlu0 %285
      %287 = vrot.lane.b32.xlu0 %v257, 123
      %v288 = vpop.permute.xlu0 %287
      %289 = vrot.lane.b32.xlu0 %v258, 123
      %v290 = vpop.permute.xlu0 %289
      %291 = vrot.lane.b32.xlu0 %v259, 123
      %v292 = vpop.permute.xlu0 %291
      %293 = vrot.lane.b32.xlu0 %v257, 122
      %v294 = vpop.permute.xlu0 %293
      %295 = vrot.lane.b32.xlu0 %v258, 122
      %v296 = vpop.permute.xlu0 %295
      %297 = vrot.lane.b32.xlu0 %v259, 122
      %v298 = vpop.permute.xlu0 %297
      %s299 = scalar_lea.vmem %s141, 48
      %v300 = vld [vmem:[%s299] sm:$0xff]
      %v301 = vld [vmem:[%s299 + $0x8] sm:$0xff]
      %v302 = vld [vmem:[%s299 + $0x10] sm:$0xff]
      %306 = vrot.lane.b32.xlu0 %v300, 127
      %v307 = vpop.permute.xlu0 %306
      %308 = vrot.lane.b32.xlu0 %v301, 127
      %v309 = vpop.permute.xlu0 %308
      %310 = vrot.lane.b32.xlu0 %v302, 127
      %v311 = vpop.permute.xlu0 %310
      %312 = vrot.lane.b32.xlu0 %v300, 126
      %v313 = vpop.permute.xlu0 %312
      %314 = vrot.lane.b32.xlu0 %v301, 126
      %v315 = vpop.permute.xlu0 %314
      %316 = vrot.lane.b32.xlu0 %v302, 126
      %v317 = vpop.permute.xlu0 %316
      %318 = vrot.lane.b32.xlu0 %v300, 125
      %v319 = vpop.permute.xlu0 %318
      %320 = vrot.lane.b32.xlu0 %v301, 125
      %v321 = vpop.permute.xlu0 %320
      %322 = vrot.lane.b32.xlu0 %v302, 125
      %v323 = vpop.permute.xlu0 %322
      %324 = vrot.lane.b32.xlu0 %v300, 124
      %v325 = vpop.permute.xlu0 %324
      %326 = vrot.lane.b32.xlu0 %v301, 124
      %v327 = vpop.permute.xlu0 %326
      %328 = vrot.lane.b32.xlu0 %v302, 124
      %v329 = vpop.permute.xlu0 %328
      %330 = vrot.lane.b32.xlu0 %v300, 123
      %v331 = vpop.permute.xlu0 %330
      %332 = vrot.lane.b32.xlu0 %v301, 123
      %v333 = vpop.permute.xlu0 %332
      %334 = vrot.lane.b32.xlu0 %v302, 123
      %v335 = vpop.permute.xlu0 %334
      %336 = vrot.lane.b32.xlu0 %v300, 122
      %v337 = vpop.permute.xlu0 %336
      %338 = vrot.lane.b32.xlu0 %v301, 122
      %v339 = vpop.permute.xlu0 %338
      %340 = vrot.lane.b32.xlu0 %v302, 122
      %v341 = vpop.permute.xlu0 %340
      %s342 = scalar_lea.vmem %s141, 72
      %v343 = vld [vmem:[%s342] sm:$0xff]
      %v344 = vld [vmem:[%s342 + $0x8] sm:$0xff]
      %v345 = vld [vmem:[%s342 + $0x10] sm:$0xff]
      %349 = vrot.lane.b32.xlu0 %v343, 127
      %v350 = vpop.permute.xlu0 %349
      %351 = vrot.lane.b32.xlu0 %v344, 127
      %v352 = vpop.permute.xlu0 %351
      %353 = vrot.lane.b32.xlu0 %v345, 127
      %v354 = vpop.permute.xlu0 %353
      %355 = vrot.lane.b32.xlu0 %v343, 126
      %v356 = vpop.permute.xlu0 %355
      %357 = vrot.lane.b32.xlu0 %v344, 126
      %v358 = vpop.permute.xlu0 %357
      %359 = vrot.lane.b32.xlu0 %v345, 126
      %v360 = vpop.permute.xlu0 %359
      %361 = vrot.lane.b32.xlu0 %v343, 125
      %v362 = vpop.permute.xlu0 %361
      %363 = vrot.lane.b32.xlu0 %v344, 125
      %v364 = vpop.permute.xlu0 %363
      %365 = vrot.lane.b32.xlu0 %v345, 125
      %v366 = vpop.permute.xlu0 %365
      %367 = vrot.lane.b32.xlu0 %v343, 124
      %v368 = vpop.permute.xlu0 %367
      %369 = vrot.lane.b32.xlu0 %v344, 124
      %v370 = vpop.permute.xlu0 %369
      %371 = vrot.lane.b32.xlu0 %v345, 124
      %v372 = vpop.permute.xlu0 %371
      %373 = vrot.lane.b32.xlu0 %v343, 123
      %v374 = vpop.permute.xlu0 %373
      %375 = vrot.lane.b32.xlu0 %v344, 123
      %v376 = vpop.permute.xlu0 %375
      %377 = vrot.lane.b32.xlu0 %v345, 123
      %v378 = vpop.permute.xlu0 %377
      %379 = vrot.lane.b32.xlu0 %v343, 122
      %v380 = vpop.permute.xlu0 %379
      %381 = vrot.lane.b32.xlu0 %v344, 122
      %v382 = vpop.permute.xlu0 %381
      %383 = vrot.lane.b32.xlu0 %v345, 122
      %v384 = vpop.permute.xlu0 %383
      %s385 = scalar_lea.vmem %s141, 96
      %v386 = vld [vmem:[%s385] sm:$0xff]
      %v387 = vld [vmem:[%s385 + $0x8] sm:$0xff]
      %v388 = vld [vmem:[%s385 + $0x10] sm:$0xff]
      %392 = vrot.lane.b32.xlu0 %v386, 127
      %v393 = vpop.permute.xlu0 %392
      %394 = vrot.lane.b32.xlu0 %v387, 127
      %v395 = vpop.permute.xlu0 %394
      %396 = vrot.lane.b32.xlu0 %v388, 127
      %v397 = vpop.permute.xlu0 %396
      %398 = vrot.lane.b32.xlu0 %v386, 126
      %v399 = vpop.permute.xlu0 %398
      %400 = vrot.lane.b32.xlu0 %v387, 126
      %v401 = vpop.permute.xlu0 %400
      %402 = vrot.lane.b32.xlu0 %v388, 126
      %v403 = vpop.permute.xlu0 %402
      %404 = vrot.lane.b32.xlu0 %v386, 125
      %v405 = vpop.permute.xlu0 %404
      %406 = vrot.lane.b32.xlu0 %v387, 125
      %v407 = vpop.permute.xlu0 %406
      %408 = vrot.lane.b32.xlu0 %v388, 125
      %v409 = vpop.permute.xlu0 %408
      %410 = vrot.lane.b32.xlu0 %v386, 124
      %v411 = vpop.permute.xlu0 %410
      %412 = vrot.lane.b32.xlu0 %v387, 124
      %v413 = vpop.permute.xlu0 %412
      %414 = vrot.lane.b32.xlu0 %v388, 124
      %v415 = vpop.permute.xlu0 %414
      %416 = vrot.lane.b32.xlu0 %v386, 123
      %v417 = vpop.permute.xlu0 %416
      %418 = vrot.lane.b32.xlu0 %v387, 123
      %v419 = vpop.permute.xlu0 %418
      %420 = vrot.lane.b32.xlu0 %v388, 123
      %v421 = vpop.permute.xlu0 %420
      %422 = vrot.lane.b32.xlu0 %v386, 122
      %v423 = vpop.permute.xlu0 %422
      %424 = vrot.lane.b32.xlu0 %v387, 122
      %v425 = vpop.permute.xlu0 %424
      %426 = vrot.lane.b32.xlu0 %v388, 122
      %v427 = vpop.permute.xlu0 %426
      %s428 = scalar_lea.vmem %s141, 120
      %v429 = vld [vmem:[%s428] sm:$0xff]
      %v430 = vld [vmem:[%s428 + $0x8] sm:$0xff]
      %v431 = vld [vmem:[%s428 + $0x10] sm:$0xff]
      %435 = vrot.lane.b32.xlu0 %v429, 127
      %v436 = vpop.permute.xlu0 %435
      %437 = vrot.lane.b32.xlu0 %v430, 127
      %v438 = vpop.permute.xlu0 %437
      %439 = vrot.lane.b32.xlu0 %v431, 127
      %v440 = vpop.permute.xlu0 %439
      %441 = vrot.lane.b32.xlu0 %v429, 126
      %v442 = vpop.permute.xlu0 %441
      %443 = vrot.lane.b32.xlu0 %v430, 126
      %v444 = vpop.permute.xlu0 %443
      %445 = vrot.lane.b32.xlu0 %v431, 126
      %v446 = vpop.permute.xlu0 %445
      %447 = vrot.lane.b32.xlu0 %v429, 125
      %v448 = vpop.permute.xlu0 %447
      %449 = vrot.lane.b32.xlu0 %v430, 125
      %v450 = vpop.permute.xlu0 %449
      %451 = vrot.lane.b32.xlu0 %v431, 125
      %v452 = vpop.permute.xlu0 %451
      %453 = vrot.lane.b32.xlu0 %v429, 124
      %v454 = vpop.permute.xlu0 %453
      %455 = vrot.lane.b32.xlu0 %v430, 124
      %v456 = vpop.permute.xlu0 %455
      %457 = vrot.lane.b32.xlu0 %v431, 124
      %v458 = vpop.permute.xlu0 %457
      %459 = vrot.lane.b32.xlu0 %v429, 123
      %v460 = vpop.permute.xlu0 %459
      %461 = vrot.lane.b32.xlu0 %v430, 123
      %v462 = vpop.permute.xlu0 %461
      %463 = vrot.lane.b32.xlu0 %v431, 123
      %v464 = vpop.permute.xlu0 %463
      %465 = vrot.lane.b32.xlu0 %v429, 122
      %v466 = vpop.permute.xlu0 %465
      %467 = vrot.lane.b32.xlu0 %v430, 122
      %v468 = vpop.permute.xlu0 %467
      %469 = vrot.lane.b32.xlu0 %v431, 122
      %v470 = vpop.permute.xlu0 %469
      %s471 = scalar_lea.vmem %s141, 144
      %v472 = vld [vmem:[%s471] sm:$0xff]
      %v473 = vld [vmem:[%s471 + $0x8] sm:$0xff]
      %v474 = vld [vmem:[%s471 + $0x10] sm:$0xff]
      %478 = vrot.lane.b32.xlu0 %v472, 127
      %v479 = vpop.permute.xlu0 %478
      %480 = vrot.lane.b32.xlu0 %v473, 127
      %v481 = vpop.permute.xlu0 %480
      %482 = vrot.lane.b32.xlu0 %v474, 127
      %v483 = vpop.permute.xlu0 %482
      %484 = vrot.lane.b32.xlu0 %v472, 126
      %v485 = vpop.permute.xlu0 %484
      %486 = vrot.lane.b32.xlu0 %v473, 126
      %v487 = vpop.permute.xlu0 %486
      %488 = vrot.lane.b32.xlu0 %v474, 126
      %v489 = vpop.permute.xlu0 %488
      %490 = vrot.lane.b32.xlu0 %v472, 125
      %v491 = vpop.permute.xlu0 %490
      %492 = vrot.lane.b32.xlu0 %v473, 125
      %v493 = vpop.permute.xlu0 %492
      %494 = vrot.lane.b32.xlu0 %v474, 125
      %v495 = vpop.permute.xlu0 %494
      %496 = vrot.lane.b32.xlu0 %v472, 124
      %v497 = vpop.permute.xlu0 %496
      %498 = vrot.lane.b32.xlu0 %v473, 124
      %v499 = vpop.permute.xlu0 %498
      %500 = vrot.lane.b32.xlu0 %v474, 124
      %v501 = vpop.permute.xlu0 %500
      %502 = vrot.lane.b32.xlu0 %v472, 123
      %v503 = vpop.permute.xlu0 %502
      %504 = vrot.lane.b32.xlu0 %v473, 123
      %v505 = vpop.permute.xlu0 %504
      %506 = vrot.lane.b32.xlu0 %v474, 123
      %v507 = vpop.permute.xlu0 %506
      %508 = vrot.lane.b32.xlu0 %v472, 122
      %v509 = vpop.permute.xlu0 %508
      %510 = vrot.lane.b32.xlu0 %v473, 122
      %v511 = vpop.permute.xlu0 %510
      %512 = vrot.lane.b32.xlu0 %v474, 122
      %v513 = vpop.permute.xlu0 %512
      %s514 = scalar_lea.vmem %s141, 168
      %v515 = vld [vmem:[%s514] sm:$0xff]
      %v516 = vld [vmem:[%s514 + $0x8] sm:$0xff]
      %v517 = vld [vmem:[%s514 + $0x10] sm:$0xff]
      %521 = vrot.lane.b32.xlu0 %v515, 127
      %v522 = vpop.permute.xlu0 %521
      %523 = vrot.lane.b32.xlu0 %v516, 127
      %v524 = vpop.permute.xlu0 %523
      %525 = vrot.lane.b32.xlu0 %v517, 127
      %v526 = vpop.permute.xlu0 %525
      %527 = vrot.lane.b32.xlu0 %v515, 126
      %v528 = vpop.permute.xlu0 %527
      %529 = vrot.lane.b32.xlu0 %v516, 126
      %v530 = vpop.permute.xlu0 %529
      %531 = vrot.lane.b32.xlu0 %v517, 126
      %v532 = vpop.permute.xlu0 %531
      %533 = vrot.lane.b32.xlu0 %v515, 125
      %v534 = vpop.permute.xlu0 %533
      %535 = vrot.lane.b32.xlu0 %v516, 125
      %v536 = vpop.permute.xlu0 %535
      %537 = vrot.lane.b32.xlu0 %v517, 125
      %v538 = vpop.permute.xlu0 %537
      %539 = vrot.lane.b32.xlu0 %v515, 124
      %v540 = vpop.permute.xlu0 %539
      %541 = vrot.lane.b32.xlu0 %v516, 124
      %v542 = vpop.permute.xlu0 %541
      %543 = vrot.lane.b32.xlu0 %v517, 124
      %v544 = vpop.permute.xlu0 %543
      %545 = vrot.lane.b32.xlu0 %v515, 123
      %v546 = vpop.permute.xlu0 %545
      %547 = vrot.lane.b32.xlu0 %v516, 123
      %v548 = vpop.permute.xlu0 %547
      %549 = vrot.lane.b32.xlu0 %v517, 123
      %v550 = vpop.permute.xlu0 %549
      %551 = vrot.lane.b32.xlu0 %v515, 122
      %v552 = vpop.permute.xlu0 %551
      %553 = vrot.lane.b32.xlu0 %v516, 122
      %v554 = vpop.permute.xlu0 %553
      %555 = vrot.lane.b32.xlu0 %v517, 122
      %v556 = vpop.permute.xlu0 %555
      %s557 = scalar_lea.vmem %s141, 192
      %v558 = vld [vmem:[%s557] sm:$0xff]
      %v559 = vld [vmem:[%s557 + $0x8] sm:$0xff]
      %v560 = vld [vmem:[%s557 + $0x10] sm:$0xff]
      %564 = vrot.lane.b32.xlu0 %v558, 127
      %v565 = vpop.permute.xlu0 %564
      %566 = vrot.lane.b32.xlu0 %v559, 127
      %v567 = vpop.permute.xlu0 %566
      %568 = vrot.lane.b32.xlu0 %v560, 127
      %v569 = vpop.permute.xlu0 %568
      %570 = vrot.lane.b32.xlu0 %v558, 126
      %v571 = vpop.permute.xlu0 %570
      %572 = vrot.lane.b32.xlu0 %v559, 126
      %v573 = vpop.permute.xlu0 %572
      %574 = vrot.lane.b32.xlu0 %v560, 126
      %v575 = vpop.permute.xlu0 %574
      %576 = vrot.lane.b32.xlu0 %v558, 125
      %v577 = vpop.permute.xlu0 %576
      %578 = vrot.lane.b32.xlu0 %v559, 125
      %v579 = vpop.permute.xlu0 %578
      %580 = vrot.lane.b32.xlu0 %v560, 125
      %v581 = vpop.permute.xlu0 %580
      %582 = vrot.lane.b32.xlu0 %v558, 124
      %v583 = vpop.permute.xlu0 %582
      %584 = vrot.lane.b32.xlu0 %v559, 124
      %v585 = vpop.permute.xlu0 %584
      %586 = vrot.lane.b32.xlu0 %v560, 124
      %v587 = vpop.permute.xlu0 %586
      %588 = vrot.lane.b32.xlu0 %v558, 123
      %v589 = vpop.permute.xlu0 %588
      %590 = vrot.lane.b32.xlu0 %v559, 123
      %v591 = vpop.permute.xlu0 %590
      %592 = vrot.lane.b32.xlu0 %v560, 123
      %v593 = vpop.permute.xlu0 %592
      %594 = vrot.lane.b32.xlu0 %v558, 122
      %v595 = vpop.permute.xlu0 %594
      %596 = vrot.lane.b32.xlu0 %v559, 122
      %v597 = vpop.permute.xlu0 %596
      %598 = vrot.lane.b32.xlu0 %v560, 122
      %v599 = vpop.permute.xlu0 %598
      %s600 = scalar_lea.vmem %s141, 216
      %v601 = vld [vmem:[%s600] sm:$0xff]
      %v602 = vld [vmem:[%s600 + $0x8] sm:$0xff]
      %v603 = vld [vmem:[%s600 + $0x10] sm:$0xff]
      %607 = vrot.lane.b32.xlu0 %v601, 127
      %v608 = vpop.permute.xlu0 %607
      %609 = vrot.lane.b32.xlu0 %v602, 127
      %v610 = vpop.permute.xlu0 %609
      %611 = vrot.lane.b32.xlu0 %v603, 127
      %v612 = vpop.permute.xlu0 %611
      %613 = vrot.lane.b32.xlu0 %v601, 126
      %v614 = vpop.permute.xlu0 %613
      %615 = vrot.lane.b32.xlu0 %v602, 126
      %v616 = vpop.permute.xlu0 %615
      %617 = vrot.lane.b32.xlu0 %v603, 126
      %v618 = vpop.permute.xlu0 %617
      %619 = vrot.lane.b32.xlu0 %v601, 125
      %v620 = vpop.permute.xlu0 %619
      %621 = vrot.lane.b32.xlu0 %v602, 125
      %v622 = vpop.permute.xlu0 %621
      %623 = vrot.lane.b32.xlu0 %v603, 125
      %v624 = vpop.permute.xlu0 %623
      %625 = vrot.lane.b32.xlu0 %v601, 124
      %v626 = vpop.permute.xlu0 %625
      %627 = vrot.lane.b32.xlu0 %v602, 124
      %v628 = vpop.permute.xlu0 %627
      %629 = vrot.lane.b32.xlu0 %v603, 124
      %v630 = vpop.permute.xlu0 %629
      %631 = vrot.lane.b32.xlu0 %v601, 123
      %v632 = vpop.permute.xlu0 %631
      %633 = vrot.lane.b32.xlu0 %v602, 123
      %v634 = vpop.permute.xlu0 %633
      %635 = vrot.lane.b32.xlu0 %v603, 123
      %v636 = vpop.permute.xlu0 %635
      %637 = vrot.lane.b32.xlu0 %v601, 122
      %v638 = vpop.permute.xlu0 %637
      %639 = vrot.lane.b32.xlu0 %v602, 122
      %v640 = vpop.permute.xlu0 %639
      %641 = vrot.lane.b32.xlu0 %v603, 122
      %v642 = vpop.permute.xlu0 %641
      %643 = vrot.lane.b32.xlu0 %v257, 10
      %v644 = vpop.permute.xlu0 %643
      %645 = vrot.lane.b32.xlu0 %v258, 10
      %v646 = vpop.permute.xlu0 %645
      %647 = vrot.lane.b32.xlu0 %v259, 10
      %v648 = vpop.permute.xlu0 %647
      %649 = vrot.lane.b32.xlu0 %v264, 10
      %v650 = vpop.permute.xlu0 %649
      %651 = vrot.lane.b32.xlu0 %v266, 10
      %v652 = vpop.permute.xlu0 %651
      %653 = vrot.lane.b32.xlu0 %v268, 10
      %v654 = vpop.permute.xlu0 %653
      %655 = vrot.lane.b32.xlu0 %v270, 10
      %v656 = vpop.permute.xlu0 %655
      %657 = vrot.lane.b32.xlu0 %v272, 10
      %v658 = vpop.permute.xlu0 %657
      %659 = vrot.lane.b32.xlu0 %v274, 10
      %v660 = vpop.permute.xlu0 %659
      %661 = vrot.lane.b32.xlu0 %v276, 10
      %v662 = vpop.permute.xlu0 %661
      %663 = vrot.lane.b32.xlu0 %v278, 10
      %v664 = vpop.permute.xlu0 %663
      %665 = vrot.lane.b32.xlu0 %v280, 10
      %v666 = vpop.permute.xlu0 %665
      %667 = vrot.lane.b32.xlu0 %v282, 10
      %v668 = vpop.permute.xlu0 %667
      %669 = vrot.lane.b32.xlu0 %v284, 10
      %v670 = vpop.permute.xlu0 %669
      %671 = vrot.lane.b32.xlu0 %v286, 10
      %v672 = vpop.permute.xlu0 %671
      %673 = vrot.lane.b32.xlu0 %v288, 10
      %v674 = vpop.permute.xlu0 %673
      %675 = vrot.lane.b32.xlu0 %v290, 10
      %v676 = vpop.permute.xlu0 %675
      %677 = vrot.lane.b32.xlu0 %v292, 10
      %v678 = vpop.permute.xlu0 %677
      %679 = vrot.lane.b32.xlu0 %v294, 10
      %v680 = vpop.permute.xlu0 %679
      %681 = vrot.lane.b32.xlu0 %v296, 10
      %v682 = vpop.permute.xlu0 %681
      %683 = vrot.lane.b32.xlu0 %v298, 10
      %v684 = vpop.permute.xlu0 %683
      %706 = vrot.lane.b32.xlu0 %v300, 20
      %v707 = vpop.permute.xlu0 %706
      %708 = vrot.lane.b32.xlu0 %v301, 20
      %v709 = vpop.permute.xlu0 %708
      %710 = vrot.lane.b32.xlu0 %v302, 20
      %v711 = vpop.permute.xlu0 %710
      %712 = vrot.lane.b32.xlu0 %v307, 20
      %v713 = vpop.permute.xlu0 %712
      %714 = vrot.lane.b32.xlu0 %v309, 20
      %v715 = vpop.permute.xlu0 %714
      %716 = vrot.lane.b32.xlu0 %v311, 20
      %v717 = vpop.permute.xlu0 %716
      %718 = vrot.lane.b32.xlu0 %v313, 20
      %v719 = vpop.permute.xlu0 %718
      %720 = vrot.lane.b32.xlu0 %v315, 20
      %v721 = vpop.permute.xlu0 %720
      %722 = vrot.lane.b32.xlu0 %v317, 20
      %v723 = vpop.permute.xlu0 %722
      %724 = vrot.lane.b32.xlu0 %v319, 20
      %v725 = vpop.permute.xlu0 %724
      %726 = vrot.lane.b32.xlu0 %v321, 20
      %v727 = vpop.permute.xlu0 %726
      %728 = vrot.lane.b32.xlu0 %v323, 20
      %v729 = vpop.permute.xlu0 %728
      %730 = vrot.lane.b32.xlu0 %v325, 20
      %v731 = vpop.permute.xlu0 %730
      %732 = vrot.lane.b32.xlu0 %v327, 20
      %v733 = vpop.permute.xlu0 %732
      %734 = vrot.lane.b32.xlu0 %v329, 20
      %v735 = vpop.permute.xlu0 %734
      %736 = vrot.lane.b32.xlu0 %v331, 20
      %v737 = vpop.permute.xlu0 %736
      %738 = vrot.lane.b32.xlu0 %v333, 20
      %v739 = vpop.permute.xlu0 %738
      %740 = vrot.lane.b32.xlu0 %v335, 20
      %v741 = vpop.permute.xlu0 %740
      %742 = vrot.lane.b32.xlu0 %v337, 20
      %v743 = vpop.permute.xlu0 %742
      %744 = vrot.lane.b32.xlu0 %v339, 20
      %v745 = vpop.permute.xlu0 %744
      %746 = vrot.lane.b32.xlu0 %v341, 20
      %v747 = vpop.permute.xlu0 %746
      %769 = vrot.lane.b32.xlu0 %v343, 30
      %v770 = vpop.permute.xlu0 %769
      %771 = vrot.lane.b32.xlu0 %v344, 30
      %v772 = vpop.permute.xlu0 %771
      %773 = vrot.lane.b32.xlu0 %v345, 30
      %v774 = vpop.permute.xlu0 %773
      %775 = vrot.lane.b32.xlu0 %v350, 30
      %v776 = vpop.permute.xlu0 %775
      %777 = vrot.lane.b32.xlu0 %v352, 30
      %v778 = vpop.permute.xlu0 %777
      %779 = vrot.lane.b32.xlu0 %v354, 30
      %v780 = vpop.permute.xlu0 %779
      %781 = vrot.lane.b32.xlu0 %v356, 30
      %v782 = vpop.permute.xlu0 %781
      %783 = vrot.lane.b32.xlu0 %v358, 30
      %v784 = vpop.permute.xlu0 %783
      %785 = vrot.lane.b32.xlu0 %v360, 30
      %v786 = vpop.permute.xlu0 %785
      %787 = vrot.lane.b32.xlu0 %v362, 30
      %v788 = vpop.permute.xlu0 %787
      %789 = vrot.lane.b32.xlu0 %v364, 30
      %v790 = vpop.permute.xlu0 %789
      %791 = vrot.lane.b32.xlu0 %v366, 30
      %v792 = vpop.permute.xlu0 %791
      %793 = vrot.lane.b32.xlu0 %v368, 30
      %v794 = vpop.permute.xlu0 %793
      %795 = vrot.lane.b32.xlu0 %v370, 30
      %v796 = vpop.permute.xlu0 %795
      %797 = vrot.lane.b32.xlu0 %v372, 30
      %v798 = vpop.permute.xlu0 %797
      %799 = vrot.lane.b32.xlu0 %v374, 30
      %v800 = vpop.permute.xlu0 %799
      %801 = vrot.lane.b32.xlu0 %v376, 30
      %v802 = vpop.permute.xlu0 %801
      %803 = vrot.lane.b32.xlu0 %v378, 30
      %v804 = vpop.permute.xlu0 %803
      %805 = vrot.lane.b32.xlu0 %v380, 30
      %v806 = vpop.permute.xlu0 %805
      %807 = vrot.lane.b32.xlu0 %v382, 30
      %v808 = vpop.permute.xlu0 %807
      %809 = vrot.lane.b32.xlu0 %v384, 30
      %v810 = vpop.permute.xlu0 %809
      %832 = vrot.lane.b32.xlu0 %v386, 40
      %v833 = vpop.permute.xlu0 %832
      %834 = vrot.lane.b32.xlu0 %v387, 40
      %v835 = vpop.permute.xlu0 %834
      %836 = vrot.lane.b32.xlu0 %v388, 40
      %v837 = vpop.permute.xlu0 %836
      %838 = vrot.lane.b32.xlu0 %v393, 40
      %v839 = vpop.permute.xlu0 %838
      %840 = vrot.lane.b32.xlu0 %v395, 40
      %v841 = vpop.permute.xlu0 %840
      %842 = vrot.lane.b32.xlu0 %v397, 40
      %v843 = vpop.permute.xlu0 %842
      %844 = vrot.lane.b32.xlu0 %v399, 40
      %v845 = vpop.permute.xlu0 %844
      %846 = vrot.lane.b32.xlu0 %v401, 40
      %v847 = vpop.permute.xlu0 %846
      %848 = vrot.lane.b32.xlu0 %v403, 40
      %v849 = vpop.permute.xlu0 %848
      %850 = vrot.lane.b32.xlu0 %v405, 40
      %v851 = vpop.permute.xlu0 %850
      %852 = vrot.lane.b32.xlu0 %v407, 40
      %v853 = vpop.permute.xlu0 %852
      %854 = vrot.lane.b32.xlu0 %v409, 40
      %v855 = vpop.permute.xlu0 %854
      %856 = vrot.lane.b32.xlu0 %v411, 40
      %v857 = vpop.permute.xlu0 %856
      %858 = vrot.lane.b32.xlu0 %v413, 40
      %v859 = vpop.permute.xlu0 %858
      %860 = vrot.lane.b32.xlu0 %v415, 40
      %v861 = vpop.permute.xlu0 %860
      %862 = vrot.lane.b32.xlu0 %v417, 40
      %v863 = vpop.permute.xlu0 %862
      %864 = vrot.lane.b32.xlu0 %v419, 40
      %v865 = vpop.permute.xlu0 %864
      %866 = vrot.lane.b32.xlu0 %v421, 40
      %v867 = vpop.permute.xlu0 %866
      %868 = vrot.lane.b32.xlu0 %v423, 40
      %v869 = vpop.permute.xlu0 %868
      %870 = vrot.lane.b32.xlu0 %v425, 40
      %v871 = vpop.permute.xlu0 %870
      %872 = vrot.lane.b32.xlu0 %v427, 40
      %v873 = vpop.permute.xlu0 %872
      %895 = vrot.lane.b32.xlu0 %v429, 50
      %v896 = vpop.permute.xlu0 %895
      %897 = vrot.lane.b32.xlu0 %v430, 50
      %v898 = vpop.permute.xlu0 %897
      %899 = vrot.lane.b32.xlu0 %v431, 50
      %v900 = vpop.permute.xlu0 %899
      %901 = vrot.lane.b32.xlu0 %v436, 50
      %v902 = vpop.permute.xlu0 %901
      %903 = vrot.lane.b32.xlu0 %v438, 50
      %v904 = vpop.permute.xlu0 %903
      %905 = vrot.lane.b32.xlu0 %v440, 50
      %v906 = vpop.permute.xlu0 %905
      %907 = vrot.lane.b32.xlu0 %v442, 50
      %v908 = vpop.permute.xlu0 %907
      %909 = vrot.lane.b32.xlu0 %v444, 50
      %v910 = vpop.permute.xlu0 %909
      %911 = vrot.lane.b32.xlu0 %v446, 50
      %v912 = vpop.permute.xlu0 %911
      %913 = vrot.lane.b32.xlu0 %v448, 50
      %v914 = vpop.permute.xlu0 %913
      %915 = vrot.lane.b32.xlu0 %v450, 50
      %v916 = vpop.permute.xlu0 %915
      %917 = vrot.lane.b32.xlu0 %v452, 50
      %v918 = vpop.permute.xlu0 %917
      %919 = vrot.lane.b32.xlu0 %v454, 50
      %v920 = vpop.permute.xlu0 %919
      %921 = vrot.lane.b32.xlu0 %v456, 50
      %v922 = vpop.permute.xlu0 %921
      %923 = vrot.lane.b32.xlu0 %v458, 50
      %v924 = vpop.permute.xlu0 %923
      %925 = vrot.lane.b32.xlu0 %v460, 50
      %v926 = vpop.permute.xlu0 %925
      %927 = vrot.lane.b32.xlu0 %v462, 50
      %v928 = vpop.permute.xlu0 %927
      %929 = vrot.lane.b32.xlu0 %v464, 50
      %v930 = vpop.permute.xlu0 %929
      %931 = vrot.lane.b32.xlu0 %v466, 50
      %v932 = vpop.permute.xlu0 %931
      %933 = vrot.lane.b32.xlu0 %v468, 50
      %v934 = vpop.permute.xlu0 %933
      %935 = vrot.lane.b32.xlu0 %v470, 50
      %v936 = vpop.permute.xlu0 %935
      %958 = vrot.lane.b32.xlu0 %v472, 60
      %v959 = vpop.permute.xlu0 %958
      %960 = vrot.lane.b32.xlu0 %v473, 60
      %v961 = vpop.permute.xlu0 %960
      %962 = vrot.lane.b32.xlu0 %v474, 60
      %v963 = vpop.permute.xlu0 %962
      %964 = vrot.lane.b32.xlu0 %v479, 60
      %v965 = vpop.permute.xlu0 %964
      %966 = vrot.lane.b32.xlu0 %v481, 60
      %v967 = vpop.permute.xlu0 %966
      %968 = vrot.lane.b32.xlu0 %v483, 60
      %v969 = vpop.permute.xlu0 %968
      %970 = vrot.lane.b32.xlu0 %v485, 60
      %v971 = vpop.permute.xlu0 %970
      %972 = vrot.lane.b32.xlu0 %v487, 60
      %v973 = vpop.permute.xlu0 %972
      %974 = vrot.lane.b32.xlu0 %v489, 60
      %v975 = vpop.permute.xlu0 %974
      %976 = vrot.lane.b32.xlu0 %v491, 60
      %v977 = vpop.permute.xlu0 %976
      %978 = vrot.lane.b32.xlu0 %v493, 60
      %v979 = vpop.permute.xlu0 %978
      %980 = vrot.lane.b32.xlu0 %v495, 60
      %v981 = vpop.permute.xlu0 %980
      %982 = vrot.lane.b32.xlu0 %v497, 60
      %v983 = vpop.permute.xlu0 %982
      %984 = vrot.lane.b32.xlu0 %v499, 60
      %v985 = vpop.permute.xlu0 %984
      %986 = vrot.lane.b32.xlu0 %v501, 60
      %v987 = vpop.permute.xlu0 %986
      %988 = vrot.lane.b32.xlu0 %v503, 60
      %v989 = vpop.permute.xlu0 %988
      %990 = vrot.lane.b32.xlu0 %v505, 60
      %v991 = vpop.permute.xlu0 %990
      %992 = vrot.lane.b32.xlu0 %v507, 60
      %v993 = vpop.permute.xlu0 %992
      %994 = vrot.lane.b32.xlu0 %v509, 60
      %v995 = vpop.permute.xlu0 %994
      %996 = vrot.lane.b32.xlu0 %v511, 60
      %v997 = vpop.permute.xlu0 %996
      %998 = vrot.lane.b32.xlu0 %v513, 60
      %v999 = vpop.permute.xlu0 %998
      %1021 = vrot.lane.b32.xlu0 %v515, 70
      %v1022 = vpop.permute.xlu0 %1021
      %1023 = vrot.lane.b32.xlu0 %v516, 70
      %v1024 = vpop.permute.xlu0 %1023
      %1025 = vrot.lane.b32.xlu0 %v517, 70
      %v1026 = vpop.permute.xlu0 %1025
      %1027 = vrot.lane.b32.xlu0 %v522, 70
      %v1028 = vpop.permute.xlu0 %1027
      %1029 = vrot.lane.b32.xlu0 %v524, 70
      %v1030 = vpop.permute.xlu0 %1029
      %1031 = vrot.lane.b32.xlu0 %v526, 70
      %v1032 = vpop.permute.xlu0 %1031
      %1033 = vrot.lane.b32.xlu0 %v528, 70
      %v1034 = vpop.permute.xlu0 %1033
      %1035 = vrot.lane.b32.xlu0 %v530, 70
      %v1036 = vpop.permute.xlu0 %1035
      %1037 = vrot.lane.b32.xlu0 %v532, 70
      %v1038 = vpop.permute.xlu0 %1037
      %1039 = vrot.lane.b32.xlu0 %v534, 70
      %v1040 = vpop.permute.xlu0 %1039
      %1041 = vrot.lane.b32.xlu0 %v536, 70
      %v1042 = vpop.permute.xlu0 %1041
      %1043 = vrot.lane.b32.xlu0 %v538, 70
      %v1044 = vpop.permute.xlu0 %1043
      %1045 = vrot.lane.b32.xlu0 %v540, 70
      %v1046 = vpop.permute.xlu0 %1045
      %1047 = vrot.lane.b32.xlu0 %v542, 70
      %v1048 = vpop.permute.xlu0 %1047
      %1049 = vrot.lane.b32.xlu0 %v544, 70
      %v1050 = vpop.permute.xlu0 %1049
      %1051 = vrot.lane.b32.xlu0 %v546, 70
      %v1052 = vpop.permute.xlu0 %1051
      %1053 = vrot.lane.b32.xlu0 %v548, 70
      %v1054 = vpop.permute.xlu0 %1053
      %1055 = vrot.lane.b32.xlu0 %v550, 70
      %v1056 = vpop.permute.xlu0 %1055
      %1057 = vrot.lane.b32.xlu0 %v552, 70
      %v1058 = vpop.permute.xlu0 %1057
      %1059 = vrot.lane.b32.xlu0 %v554, 70
      %v1060 = vpop.permute.xlu0 %1059
      %1061 = vrot.lane.b32.xlu0 %v556, 70
      %v1062 = vpop.permute.xlu0 %1061
      %1084 = vrot.lane.b32.xlu0 %v558, 80
      %v1085 = vpop.permute.xlu0 %1084
      %1086 = vrot.lane.b32.xlu0 %v559, 80
      %v1087 = vpop.permute.xlu0 %1086
      %1088 = vrot.lane.b32.xlu0 %v560, 80
      %v1089 = vpop.permute.xlu0 %1088
      %1090 = vrot.lane.b32.xlu0 %v565, 80
      %v1091 = vpop.permute.xlu0 %1090
      %1092 = vrot.lane.b32.xlu0 %v567, 80
      %v1093 = vpop.permute.xlu0 %1092
      %1094 = vrot.lane.b32.xlu0 %v569, 80
      %v1095 = vpop.permute.xlu0 %1094
      %1096 = vrot.lane.b32.xlu0 %v571, 80
      %v1097 = vpop.permute.xlu0 %1096
      %1098 = vrot.lane.b32.xlu0 %v573, 80
      %v1099 = vpop.permute.xlu0 %1098
      %1100 = vrot.lane.b32.xlu0 %v575, 80
      %v1101 = vpop.permute.xlu0 %1100
      %1102 = vrot.lane.b32.xlu0 %v577, 80
      %v1103 = vpop.permute.xlu0 %1102
      %1104 = vrot.lane.b32.xlu0 %v579, 80
      %v1105 = vpop.permute.xlu0 %1104
      %1106 = vrot.lane.b32.xlu0 %v581, 80
      %v1107 = vpop.permute.xlu0 %1106
      %1108 = vrot.lane.b32.xlu0 %v583, 80
      %v1109 = vpop.permute.xlu0 %1108
      %1110 = vrot.lane.b32.xlu0 %v585, 80
      %v1111 = vpop.permute.xlu0 %1110
      %1112 = vrot.lane.b32.xlu0 %v587, 80
      %v1113 = vpop.permute.xlu0 %1112
      %1114 = vrot.lane.b32.xlu0 %v589, 80
      %v1115 = vpop.permute.xlu0 %1114
      %1116 = vrot.lane.b32.xlu0 %v591, 80
      %v1117 = vpop.permute.xlu0 %1116
      %1118 = vrot.lane.b32.xlu0 %v593, 80
      %v1119 = vpop.permute.xlu0 %1118
      %1120 = vrot.lane.b32.xlu0 %v595, 80
      %v1121 = vpop.permute.xlu0 %1120
      %1122 = vrot.lane.b32.xlu0 %v597, 80
      %v1123 = vpop.permute.xlu0 %1122
      %1124 = vrot.lane.b32.xlu0 %v599, 80
      %v1125 = vpop.permute.xlu0 %1124
      %1147 = vrot.lane.b32.xlu0 %v601, 90
      %v1148 = vpop.permute.xlu0 %1147
      %1149 = vrot.lane.b32.xlu0 %v602, 90
      %v1150 = vpop.permute.xlu0 %1149
      %1151 = vrot.lane.b32.xlu0 %v603, 90
      %v1152 = vpop.permute.xlu0 %1151
      %1153 = vrot.lane.b32.xlu0 %v608, 90
      %v1154 = vpop.permute.xlu0 %1153
      %1155 = vrot.lane.b32.xlu0 %v610, 90
      %v1156 = vpop.permute.xlu0 %1155
      %1157 = vrot.lane.b32.xlu0 %v612, 90
      %v1158 = vpop.permute.xlu0 %1157
      %1159 = vrot.lane.b32.xlu0 %v614, 90
      %v1160 = vpop.permute.xlu0 %1159
      %1161 = vrot.lane.b32.xlu0 %v616, 90
      %v1162 = vpop.permute.xlu0 %1161
      %1163 = vrot.lane.b32.xlu0 %v618, 90
      %v1164 = vpop.permute.xlu0 %1163
      %1165 = vrot.lane.b32.xlu0 %v620, 90
      %v1166 = vpop.permute.xlu0 %1165
      %1167 = vrot.lane.b32.xlu0 %v622, 90
      %v1168 = vpop.permute.xlu0 %1167
      %1169 = vrot.lane.b32.xlu0 %v624, 90
      %v1170 = vpop.permute.xlu0 %1169
      %1171 = vrot.lane.b32.xlu0 %v626, 90
      %v1172 = vpop.permute.xlu0 %1171
      %1173 = vrot.lane.b32.xlu0 %v628, 90
      %v1174 = vpop.permute.xlu0 %1173
      %1175 = vrot.lane.b32.xlu0 %v630, 90
      %v1176 = vpop.permute.xlu0 %1175
      %1177 = vrot.lane.b32.xlu0 %v632, 90
      %v1178 = vpop.permute.xlu0 %1177
      %1179 = vrot.lane.b32.xlu0 %v634, 90
      %v1180 = vpop.permute.xlu0 %1179
      %1181 = vrot.lane.b32.xlu0 %v636, 90
      %v1182 = vpop.permute.xlu0 %1181
      %1183 = vrot.lane.b32.xlu0 %v638, 90
      %v1184 = vpop.permute.xlu0 %1183
      %1185 = vrot.lane.b32.xlu0 %v640, 90
      %v1186 = vpop.permute.xlu0 %1185
      %1187 = vrot.lane.b32.xlu0 %v642, 90
      %v1188 = vpop.permute.xlu0 %1187
      %vm1210 = vcmask 80896
      %v1211 = vsel %vm1210, %v196, %v644
      %v1212 = vsel %vm1210, %v197, %v646
      %v1213 = vsel %vm1210, %v198, %v648
      %v1214 = vsel %vm1210, %v203, %v650
      %v1215 = vsel %vm1210, %v205, %v652
      %v1216 = vsel %vm1210, %v207, %v654
      %v1217 = vsel %vm1210, %v212, %v656
      %v1218 = vsel %vm1210, %v214, %v658
      %v1219 = vsel %vm1210, %v216, %v660
      %v1220 = vsel %vm1210, %v221, %v662
      %v1221 = vsel %vm1210, %v223, %v664
      %v1222 = vsel %vm1210, %v225, %v666
      %v1223 = vsel %vm1210, %v230, %v668
      %v1224 = vsel %vm1210, %v232, %v670
      %v1225 = vsel %vm1210, %v234, %v672
      %v1226 = vsel %vm1210, %v239, %v674
      %v1227 = vsel %vm1210, %v241, %v676
      %v1228 = vsel %vm1210, %v243, %v678
      %v1229 = vsel %vm1210, %v248, %v680
      %v1230 = vsel %vm1210, %v250, %v682
      %v1231 = vsel %vm1210, %v252, %v684
      %vm1232 = vcmask 162816
      %v1233 = vsel %vm1232, %v1211, %v707
      %v1234 = vsel %vm1232, %v1212, %v709
      %v1235 = vsel %vm1232, %v1213, %v711
      %v1236 = vsel %vm1232, %v1214, %v713
      %v1237 = vsel %vm1232, %v1215, %v715
      %v1238 = vsel %vm1232, %v1216, %v717
      %v1239 = vsel %vm1232, %v1217, %v719
      %v1240 = vsel %vm1232, %v1218, %v721
      %v1241 = vsel %vm1232, %v1219, %v723
      %v1242 = vsel %vm1232, %v1220, %v725
      %v1243 = vsel %vm1232, %v1221, %v727
      %v1244 = vsel %vm1232, %v1222, %v729
      %v1245 = vsel %vm1232, %v1223, %v731
      %v1246 = vsel %vm1232, %v1224, %v733
      %v1247 = vsel %vm1232, %v1225, %v735
      %v1248 = vsel %vm1232, %v1226, %v737
      %v1249 = vsel %vm1232, %v1227, %v739
      %v1250 = vsel %vm1232, %v1228, %v741
      %v1251 = vsel %vm1232, %v1229, %v743
      %v1252 = vsel %vm1232, %v1230, %v745
      %v1253 = vsel %vm1232, %v1231, %v747
      %vm1254 = vcmask 244736
      %v1255 = vsel %vm1254, %v1233, %v770
      %v1256 = vsel %vm1254, %v1234, %v772
      %v1257 = vsel %vm1254, %v1235, %v774
      %v1258 = vsel %vm1254, %v1236, %v776
      %v1259 = vsel %vm1254, %v1237, %v778
      %v1260 = vsel %vm1254, %v1238, %v780
      %v1261 = vsel %vm1254, %v1239, %v782
      %v1262 = vsel %vm1254, %v1240, %v784
      %v1263 = vsel %vm1254, %v1241, %v786
      %v1264 = vsel %vm1254, %v1242, %v788
      %v1265 = vsel %vm1254, %v1243, %v790
      %v1266 = vsel %vm1254, %v1244, %v792
      %v1267 = vsel %vm1254, %v1245, %v794
      %v1268 = vsel %vm1254, %v1246, %v796
      %v1269 = vsel %vm1254, %v1247, %v798
      %v1270 = vsel %vm1254, %v1248, %v800
      %v1271 = vsel %vm1254, %v1249, %v802
      %v1272 = vsel %vm1254, %v1250, %v804
      %v1273 = vsel %vm1254, %v1251, %v806
      %v1274 = vsel %vm1254, %v1252, %v808
      %v1275 = vsel %vm1254, %v1253, %v810
      %vm1276 = vcmask 326656
      %v1277 = vsel %vm1276, %v1255, %v833
      %v1278 = vsel %vm1276, %v1256, %v835
      %v1279 = vsel %vm1276, %v1257, %v837
      %v1280 = vsel %vm1276, %v1258, %v839
      %v1281 = vsel %vm1276, %v1259, %v841
      %v1282 = vsel %vm1276, %v1260, %v843
      %v1283 = vsel %vm1276, %v1261, %v845
      %v1284 = vsel %vm1276, %v1262, %v847
      %v1285 = vsel %vm1276, %v1263, %v849
      %v1286 = vsel %vm1276, %v1264, %v851
      %v1287 = vsel %vm1276, %v1265, %v853
      %v1288 = vsel %vm1276, %v1266, %v855
      %v1289 = vsel %vm1276, %v1267, %v857
      %v1290 = vsel %vm1276, %v1268, %v859
      %v1291 = vsel %vm1276, %v1269, %v861
      %v1292 = vsel %vm1276, %v1270, %v863
      %v1293 = vsel %vm1276, %v1271, %v865
      %v1294 = vsel %vm1276, %v1272, %v867
      %v1295 = vsel %vm1276, %v1273, %v869
      %v1296 = vsel %vm1276, %v1274, %v871
      %v1297 = vsel %vm1276, %v1275, %v873
      %vm1298 = vcmask 408576
      %v1299 = vsel %vm1298, %v1277, %v896
      %v1300 = vsel %vm1298, %v1278, %v898
      %v1301 = vsel %vm1298, %v1279, %v900
      %v1302 = vsel %vm1298, %v1280, %v902
      %v1303 = vsel %vm1298, %v1281, %v904
      %v1304 = vsel %vm1298, %v1282, %v906
      %v1305 = vsel %vm1298, %v1283, %v908
      %v1306 = vsel %vm1298, %v1284, %v910
      %v1307 = vsel %vm1298, %v1285, %v912
      %v1308 = vsel %vm1298, %v1286, %v914
      %v1309 = vsel %vm1298, %v1287, %v916
      %v1310 = vsel %vm1298, %v1288, %v918
      %v1311 = vsel %vm1298, %v1289, %v920
      %v1312 = vsel %vm1298, %v1290, %v922
      %v1313 = vsel %vm1298, %v1291, %v924
      %v1314 = vsel %vm1298, %v1292, %v926
      %v1315 = vsel %vm1298, %v1293, %v928
      %v1316 = vsel %vm1298, %v1294, %v930
      %v1317 = vsel %vm1298, %v1295, %v932
      %v1318 = vsel %vm1298, %v1296, %v934
      %v1319 = vsel %vm1298, %v1297, %v936
      %vm1320 = vcmask 490496
      %v1321 = vsel %vm1320, %v1299, %v959
      %v1322 = vsel %vm1320, %v1300, %v961
      %v1323 = vsel %vm1320, %v1301, %v963
      %v1324 = vsel %vm1320, %v1302, %v965
      %v1325 = vsel %vm1320, %v1303, %v967
      %v1326 = vsel %vm1320, %v1304, %v969
      %v1327 = vsel %vm1320, %v1305, %v971
      %v1328 = vsel %vm1320, %v1306, %v973
      %v1329 = vsel %vm1320, %v1307, %v975
      %v1330 = vsel %vm1320, %v1308, %v977
      %v1331 = vsel %vm1320, %v1309, %v979
      %v1332 = vsel %vm1320, %v1310, %v981
      %v1333 = vsel %vm1320, %v1311, %v983
      %v1334 = vsel %vm1320, %v1312, %v985
      %v1335 = vsel %vm1320, %v1313, %v987
      %v1336 = vsel %vm1320, %v1314, %v989
      %v1337 = vsel %vm1320, %v1315, %v991
      %v1338 = vsel %vm1320, %v1316, %v993
      %v1339 = vsel %vm1320, %v1317, %v995
      %v1340 = vsel %vm1320, %v1318, %v997
      %v1341 = vsel %vm1320, %v1319, %v999
      %vm1342 = vcmask 572416
      %v1343 = vsel %vm1342, %v1321, %v1022
      %v1344 = vsel %vm1342, %v1322, %v1024
      %v1345 = vsel %vm1342, %v1323, %v1026
      %v1346 = vsel %vm1342, %v1324, %v1028
      %v1347 = vsel %vm1342, %v1325, %v1030
      %v1348 = vsel %vm1342, %v1326, %v1032
      %v1349 = vsel %vm1342, %v1327, %v1034
      %v1350 = vsel %vm1342, %v1328, %v1036
      %v1351 = vsel %vm1342, %v1329, %v1038
      %v1352 = vsel %vm1342, %v1330, %v1040
      %v1353 = vsel %vm1342, %v1331, %v1042
      %v1354 = vsel %vm1342, %v1332, %v1044
      %v1355 = vsel %vm1342, %v1333, %v1046
      %v1356 = vsel %vm1342, %v1334, %v1048
      %v1357 = vsel %vm1342, %v1335, %v1050
      %v1358 = vsel %vm1342, %v1336, %v1052
      %v1359 = vsel %vm1342, %v1337, %v1054
      %v1360 = vsel %vm1342, %v1338, %v1056
      %v1361 = vsel %vm1342, %v1339, %v1058
      %v1362 = vsel %vm1342, %v1340, %v1060
      %v1363 = vsel %vm1342, %v1341, %v1062
      %vm1364 = vcmask 654336
      %v1365 = vsel %vm1364, %v1343, %v1085
      %v1366 = vsel %vm1364, %v1344, %v1087
      %v1367 = vsel %vm1364, %v1345, %v1089
      %v1368 = vsel %vm1364, %v1346, %v1091
      %v1369 = vsel %vm1364, %v1347, %v1093
      %v1370 = vsel %vm1364, %v1348, %v1095
      %v1371 = vsel %vm1364, %v1349, %v1097
      %v1372 = vsel %vm1364, %v1350, %v1099
      %v1373 = vsel %vm1364, %v1351, %v1101
      %v1374 = vsel %vm1364, %v1352, %v1103
      %v1375 = vsel %vm1364, %v1353, %v1105
      %v1376 = vsel %vm1364, %v1354, %v1107
      %v1377 = vsel %vm1364, %v1355, %v1109
      %v1378 = vsel %vm1364, %v1356, %v1111
      %v1379 = vsel %vm1364, %v1357, %v1113
      %v1380 = vsel %vm1364, %v1358, %v1115
      %v1381 = vsel %vm1364, %v1359, %v1117
      %v1382 = vsel %vm1364, %v1360, %v1119
      %v1383 = vsel %vm1364, %v1361, %v1121
      %v1384 = vsel %vm1364, %v1362, %v1123
      %v1385 = vsel %vm1364, %v1363, %v1125
      %vm1386 = vcmask 736256
      %v1387 = vsel %vm1386, %v1365, %v1148
      %v1388 = vsel %vm1386, %v1366, %v1150
      %v1389 = vsel %vm1386, %v1367, %v1152
      %v1390 = vsel %vm1386, %v1368, %v1154
      %v1391 = vsel %vm1386, %v1369, %v1156
      %v1392 = vsel %vm1386, %v1370, %v1158
      %v1393 = vsel %vm1386, %v1371, %v1160
      %v1394 = vsel %vm1386, %v1372, %v1162
      %v1395 = vsel %vm1386, %v1373, %v1164
      %v1396 = vsel %vm1386, %v1374, %v1166
      %v1397 = vsel %vm1386, %v1375, %v1168
      %v1398 = vsel %vm1386, %v1376, %v1170
      %v1399 = vsel %vm1386, %v1377, %v1172
      %v1400 = vsel %vm1386, %v1378, %v1174
      %v1401 = vsel %vm1386, %v1379, %v1176
      %v1402 = vsel %vm1386, %v1380, %v1178
      %v1403 = vsel %vm1386, %v1381, %v1180
      %v1404 = vsel %vm1386, %v1382, %v1182
      %v1405 = vsel %vm1386, %v1383, %v1184
      %v1406 = vsel %vm1386, %v1384, %v1186
      %v1407 = vsel %vm1386, %v1385, %v1188
      %vm1408 = vcmask 818176
      %v1409 = vsel %vm1408, %v1387, 0.0
      %v1410 = vsel %vm1408, %v1388, 0.0
      %v1411 = vadd.f32 %v1409, %v1410
      %v1412 = vsel %vm1408, %v1389, 0.0
      %v1413 = vadd.f32 %v1411, %v1412
      %v1414 = vsel %vm1408, %v1390, 0.0
      %v1415 = vadd.f32 %v1413, %v1414
      %v1416 = vsel %vm1408, %v1391, 0.0
      %v1417 = vadd.f32 %v1415, %v1416
      %v1418 = vsel %vm1408, %v1392, 0.0
      %v1419 = vadd.f32 %v1417, %v1418
      %v1420 = vsel %vm1408, %v1393, 0.0
      %v1421 = vadd.f32 %v1419, %v1420
      %v1422 = vsel %vm1408, %v1394, 0.0
      %v1423 = vadd.f32 %v1421, %v1422
      %v1424 = vsel %vm1408, %v1395, 0.0
      %v1425 = vadd.f32 %v1423, %v1424
      %v1426 = vsel %vm1408, %v1396, 0.0
      %v1427 = vadd.f32 %v1425, %v1426
      %v1428 = vsel %vm1408, %v1397, 0.0
      %v1429 = vadd.f32 %v1427, %v1428
      %v1430 = vsel %vm1408, %v1398, 0.0
      %v1431 = vadd.f32 %v1429, %v1430
      %v1432 = vsel %vm1408, %v1399, 0.0
      %v1433 = vadd.f32 %v1431, %v1432
      %v1434 = vsel %vm1408, %v1400, 0.0
      %v1435 = vadd.f32 %v1433, %v1434
      %v1436 = vsel %vm1408, %v1401, 0.0
      %v1437 = vadd.f32 %v1435, %v1436
      %v1438 = vsel %vm1408, %v1402, 0.0
      %v1439 = vadd.f32 %v1437, %v1438
      %v1440 = vsel %vm1408, %v1403, 0.0
      %v1441 = vadd.f32 %v1439, %v1440
      %v1442 = vsel %vm1408, %v1404, 0.0
      %v1443 = vadd.f32 %v1441, %v1442
      %v1444 = vsel %vm1408, %v1405, 0.0
      %v1445 = vadd.f32 %v1443, %v1444
      %v1446 = vsel %vm1408, %v1406, 0.0
      %v1447 = vadd.f32 %v1445, %v1446
      %v1448 = vsel %vm1408, %v1407, 0.0
      %v1449 = vadd.f32 %v1447, %v1448
      %v1450 = vrot.slane %v1449, 4
      %v1451 = vadd.f32 %v1449, %v1450
      %v1452 = vrot.slane %v1451, 2
      %v1453 = vadd.f32 %v1451, %v1452
      %v1454 = vrot.slane %v1453, 1
      %v1455 = vadd.f32 %v1453, %v1454
      %v1456 = vmul.f32 %v1455, 0.006802721
      %v1457 = vsub.f32 %v1387, %v1456
      %v1458 = vsub.f32 %v1388, %v1456
      %v1459 = vsub.f32 %v1389, %v1456
      %v1460 = vsub.f32 %v1390, %v1456
      %v1461 = vsub.f32 %v1391, %v1456
      %v1462 = vsub.f32 %v1392, %v1456
      %v1463 = vsub.f32 %v1393, %v1456
      %v1464 = vsub.f32 %v1394, %v1456
      %v1465 = vsub.f32 %v1395, %v1456
      %v1466 = vsub.f32 %v1396, %v1456
      %v1467 = vsub.f32 %v1397, %v1456
      %v1468 = vsub.f32 %v1398, %v1456
      %v1469 = vsub.f32 %v1399, %v1456
      %v1470 = vsub.f32 %v1400, %v1456
      %v1471 = vsub.f32 %v1401, %v1456
      %v1472 = vsub.f32 %v1402, %v1456
      %v1473 = vsub.f32 %v1403, %v1456
      %v1474 = vsub.f32 %v1404, %v1456
      %v1475 = vsub.f32 %v1405, %v1456
      %v1476 = vsub.f32 %v1406, %v1456
      %v1477 = vsub.f32 %v1407, %v1456
      %v1478 = vpack.c.bf16 %v1458, %v1457
      %v1479 = vpack.c.bf16 %v1460, %v1459
      %v1480 = vpack.c.bf16 %v1462, %v1461
      %v1481 = vpack.c.bf16 %v1464, %v1463
      %v1482 = vpack.c.bf16 %v1466, %v1465
      %v1483 = vpack.c.bf16 %v1468, %v1467
      %v1484 = vpack.c.bf16 %v1470, %v1469
      %v1485 = vpack.c.bf16 %v1472, %v1471
      %v1486 = vpack.c.bf16 %v1474, %v1473
      %v1487 = vpack.c.bf16 %v1476, %v1475
      %v1488 = vpack.c.bf16 %v1477, %v1477
      %v1489 = vld [vmem:[%s147] sm:$0xff]
      %v1490 = vld [vmem:[%s147 + $0x8] sm:$0xff]
      %v1491 = vld [vmem:[%s147 + $0x10] sm:$0xff]
      %v1492 = vld [vmem:[%s147 + $0x18] sm:$0xff]
      %v1493 = vld [vmem:[%s147 + $0x20] sm:$0xff]
      %v1494 = vld [vmem:[%s147 + $0x28] sm:$0xff]
      %v1495 = vld [vmem:[%s147 + $0x30] sm:$0xff]
      %v1496 = vld [vmem:[%s147 + $0x38] sm:$0xff]
      %v1497 = vld [vmem:[%s147 + $0x40] sm:$0xff]
      %v1498 = vld [vmem:[%s147 + $0x48] sm:$0xff]
      %v1499 = vld [vmem:[%s147 + $0x50] sm:$0xff]
      %v1500 = vld [vmem:[%s147 + $0x58] sm:$0xff]
      %v1501 = vld [vmem:[%s147 + $0x60] sm:$0xff]
      %v1502 = vld [vmem:[%s147 + $0x68] sm:$0xff]
      %v1503 = vld [vmem:[%s147 + $0x70] sm:$0xff]
      %v1504 = vld [vmem:[%s147 + $0x78] sm:$0xff]
      %v1505 = vld [vmem:[%s147 + $0x80] sm:$0xff]
      %v1506 = vld [vmem:[%s147 + $0x88] sm:$0xff]
      %v1507 = vld [vmem:[%s147 + $0x90] sm:$0xff]
      %v1508 = vld [vmem:[%s147 + $0x98] sm:$0xff]
      %v1509 = vld [vmem:[%s147 + $0xa0] sm:$0xff]
      %v1510 = vld [vmem:[%s147 + $0xa8] sm:$0xff]
      %v1511 = vld [vmem:[%s147 + $0xb0] sm:$0xff]
      %v1512 = vld [vmem:[%s147 + $0xb8] sm:$0xff]
      %v1513 = vld [vmem:[%s147 + $0xc0] sm:$0xff]
      %v1514 = vld [vmem:[%s147 + $0xc8] sm:$0xff]
      %v1515 = vld [vmem:[%s147 + $0xd0] sm:$0xff]
      %v1516 = vld [vmem:[%s147 + $0xd8] sm:$0xff]
      %v1517 = vld [vmem:[%s147 + $0xe0] sm:$0xff]
      %v1518 = vld [vmem:[%s147 + $0xe8] sm:$0xff]
      %v1519 = vld [vmem:[%s147 + $0xf0] sm:$0xff]
      %v1520 = vld [vmem:[%s147 + $0xf8] sm:$0xff]
      %v1521 = vld [vmem:[%s147 + $0x100] sm:$0xff]
      %v1522 = vld [vmem:[%s147 + $0x108] sm:$0xff]
      %v1523 = vld [vmem:[%s147 + $0x110] sm:$0xff]
      %v1524 = vld [vmem:[%s147 + $0x118] sm:$0xff]
      %v1525 = vld [vmem:[%s147 + $0x120] sm:$0xff]
      %v1526 = vld [vmem:[%s147 + $0x128] sm:$0xff]
      %v1527 = vld [vmem:[%s147 + $0x130] sm:$0xff]
      %v1528 = vld [vmem:[%s147 + $0x138] sm:$0xff]
      %v1529 = vld [vmem:[%s147 + $0x140] sm:$0xff]
      %v1530 = vld [vmem:[%s147 + $0x148] sm:$0xff]
      %v1532 = vsel %vm1408, %v1478, 0
      %v1535 = vsel %vm1408, %v1479, 0
      %v1538 = vsel %vm1408, %v1480, 0
      %v1541 = vsel %vm1408, %v1481, 0
      %v1544 = vsel %vm1408, %v1482, 0
      %v1547 = vsel %vm1408, %v1483, 0
      %v1550 = vsel %vm1408, %v1484, 0
      %v1553 = vsel %vm1408, %v1485, 0
      %v1556 = vsel %vm1408, %v1486, 0
      %v1559 = vsel %vm1408, %v1487, 0
      %v1562 = vsel %vm1408, %v1488, 0
      %1564 = vmatpush.bf16.xpose.msra.mxu0 %v1553
      %1565 = vmatpush.bf16.xpose.msra.mxu0 %v1550
      %1566 = vmatpush.bf16.xpose.msra.mxu0 %v1547
      %1567 = vmatpush.bf16.xpose.msra.mxu0 %v1544
      %1568 = vmatpush.bf16.xpose.msra.mxu0 %v1541
      %1569 = vmatpush.bf16.xpose.msra.mxu0 %v1538
      %1570 = vmatpush.bf16.xpose.msra.mxu0 %v1535
      %1571 = vmatpush.bf16.xpose.msra.mxu0 %v1532
      %1572 = vmatmul.bf16.gmra.mxu0 %v1532
      %v1573 = vpop.f32.mrf.mxu0
      %v1574 = vadd.f32 0.0, %v1573
      %v1575 = vpop.f32.mrf.mxu0
      %v1576 = vadd.f32 0.0, %v1575
      %1577 = vmatmul.bf16.gmra.mxu0 %v1535
      %v1578 = vpop.f32.mrf.mxu0
      %v1579 = vadd.f32 0.0, %v1578
      %v1580 = vpop.f32.mrf.mxu0
      %v1581 = vadd.f32 0.0, %v1580
      %1582 = vmatmul.bf16.gmra.mxu0 %v1538
      %v1583 = vpop.f32.mrf.mxu0
      %v1584 = vadd.f32 0.0, %v1583
      %v1585 = vpop.f32.mrf.mxu0
      %v1586 = vadd.f32 0.0, %v1585
      %1587 = vmatmul.bf16.gmra.mxu0 %v1541
      %v1588 = vpop.f32.mrf.mxu0
      %v1589 = vadd.f32 0.0, %v1588
      %v1590 = vpop.f32.mrf.mxu0
      %v1591 = vadd.f32 0.0, %v1590
      %1592 = vmatmul.bf16.gmra.mxu0 %v1544
      %v1593 = vpop.f32.mrf.mxu0
      %v1594 = vadd.f32 0.0, %v1593
      %v1595 = vpop.f32.mrf.mxu0
      %v1596 = vadd.f32 0.0, %v1595
      %1597 = vmatmul.bf16.gmra.mxu0 %v1547
      %v1598 = vpop.f32.mrf.mxu0
      %v1599 = vadd.f32 0.0, %v1598
      %v1600 = vpop.f32.mrf.mxu0
      %v1601 = vadd.f32 0.0, %v1600
      %1602 = vmatmul.bf16.gmra.mxu0 %v1550
      %v1603 = vpop.f32.mrf.mxu0
      %v1604 = vadd.f32 0.0, %v1603
      %v1605 = vpop.f32.mrf.mxu0
      %v1606 = vadd.f32 0.0, %v1605
      %1607 = vmatmul.bf16.gmra.mxu0 %v1553
      %v1608 = vpop.f32.mrf.mxu0
      %v1609 = vadd.f32 0.0, %v1608
      %v1610 = vpop.f32.mrf.mxu0
      %v1611 = vadd.f32 0.0, %v1610
      %1612 = vmatmul.bf16.gmra.mxu0 %v1556
      %v1613 = vpop.f32.mrf.mxu0
      %v1614 = vadd.f32 0.0, %v1613
      %v1615 = vpop.f32.mrf.mxu0
      %v1616 = vadd.f32 0.0, %v1615
      %1617 = vmatmul.bf16.gmra.mxu0 %v1559
      %v1618 = vpop.f32.mrf.mxu0
      %v1619 = vadd.f32 0.0, %v1618
      %v1620 = vpop.f32.mrf.mxu0
      %v1621 = vadd.f32 0.0, %v1620
      %1622 = vmatmul.bf16.gmra.mxu0 %v1562
      %v1623 = vpop.f32.mrf.mxu0
      %v1624 = vadd.f32 0.0, %v1623
      %v1625 = vpop.f32.mrf.mxu0
      %1626 = vdwg.mxu0
      %1627 = vmatpush.bf16.xpose.msra.mxu0 0
      %1628 = vmatpush.bf16.xpose.msra.mxu0 0
      %1629 = vmatpush.bf16.xpose.msra.mxu0 0
      %1630 = vmatpush.bf16.xpose.msra.mxu0 0
      %1631 = vmatpush.bf16.xpose.msra.mxu0 0
      %1632 = vmatpush.bf16.xpose.msra.mxu0 %v1562
      %1633 = vmatpush.bf16.xpose.msra.mxu0 %v1559
      %1634 = vmatpush.bf16.xpose.msra.mxu0 %v1556
      %1635 = vmatmul.bf16.gmra.mxu0 %v1532
      %v1636 = vpop.f32.mrf.mxu0
      %v1637 = vadd.f32 0.0, %v1636
      %v1638 = vpop.f32.mrf.mxu0
      %v1639 = vadd.f32 0.0, %v1638
      %1640 = vmatmul.bf16.gmra.mxu0 %v1535
      %v1641 = vpop.f32.mrf.mxu0
      %v1642 = vadd.f32 0.0, %v1641
      %v1643 = vpop.f32.mrf.mxu0
      %v1644 = vadd.f32 0.0, %v1643
      %1645 = vmatmul.bf16.gmra.mxu0 %v1538
      %v1646 = vpop.f32.mrf.mxu0
      %v1647 = vadd.f32 0.0, %v1646
      %v1648 = vpop.f32.mrf.mxu0
      %v1649 = vadd.f32 0.0, %v1648
      %1650 = vmatmul.bf16.gmra.mxu0 %v1541
      %v1651 = vpop.f32.mrf.mxu0
      %v1652 = vadd.f32 0.0, %v1651
      %v1653 = vpop.f32.mrf.mxu0
      %v1654 = vadd.f32 0.0, %v1653
      %1655 = vmatmul.bf16.gmra.mxu0 %v1544
      %v1656 = vpop.f32.mrf.mxu0
      %v1657 = vadd.f32 0.0, %v1656
      %v1658 = vpop.f32.mrf.mxu0
      %v1659 = vadd.f32 0.0, %v1658
      %1660 = vmatmul.bf16.gmra.mxu0 %v1547
      %v1661 = vpop.f32.mrf.mxu0
      %v1662 = vadd.f32 0.0, %v1661
      %v1663 = vpop.f32.mrf.mxu0
      %v1664 = vadd.f32 0.0, %v1663
      %1665 = vmatmul.bf16.gmra.mxu0 %v1550
      %v1666 = vpop.f32.mrf.mxu0
      %v1667 = vadd.f32 0.0, %v1666
      %v1668 = vpop.f32.mrf.mxu0
      %v1669 = vadd.f32 0.0, %v1668
      %1670 = vmatmul.bf16.gmra.mxu0 %v1553
      %v1671 = vpop.f32.mrf.mxu0
      %v1672 = vadd.f32 0.0, %v1671
      %v1673 = vpop.f32.mrf.mxu0
      %v1674 = vadd.f32 0.0, %v1673
      %1675 = vmatmul.bf16.gmra.mxu0 %v1556
      %v1676 = vpop.f32.mrf.mxu0
      %v1677 = vadd.f32 0.0, %v1676
      %v1678 = vpop.f32.mrf.mxu0
      %v1679 = vadd.f32 0.0, %v1678
      %1680 = vmatmul.bf16.gmra.mxu0 %v1559
      %v1681 = vpop.f32.mrf.mxu0
      %v1682 = vadd.f32 0.0, %v1681
      %v1683 = vpop.f32.mrf.mxu0
      %v1684 = vadd.f32 0.0, %v1683
      %1685 = vmatmul.bf16.gmra.mxu0 %v1562
      %v1686 = vpop.f32.mrf.mxu0
      %v1687 = vadd.f32 0.0, %v1686
      %v1688 = vpop.f32.mrf.mxu0
      %1689 = vdwg.mxu0
      %v1690 = vadd.f32 %v1489, %v1574
      %v1691 = vadd.f32 %v1490, %v1637
      %v1692 = vadd.f32 %v1491, %v1576
      %v1693 = vadd.f32 %v1492, %v1639
      %v1694 = vadd.f32 %v1493, %v1579
      %v1695 = vadd.f32 %v1494, %v1642
      %v1696 = vadd.f32 %v1495, %v1581
      %v1697 = vadd.f32 %v1496, %v1644
      %v1698 = vadd.f32 %v1497, %v1584
      %v1699 = vadd.f32 %v1498, %v1647
      %v1700 = vadd.f32 %v1499, %v1586
      %v1701 = vadd.f32 %v1500, %v1649
      %v1702 = vadd.f32 %v1501, %v1589
      %v1703 = vadd.f32 %v1502, %v1652
      %v1704 = vadd.f32 %v1503, %v1591
      %v1705 = vadd.f32 %v1504, %v1654
      %v1706 = vadd.f32 %v1505, %v1594
      %v1707 = vadd.f32 %v1506, %v1657
      %v1708 = vadd.f32 %v1507, %v1596
      %v1709 = vadd.f32 %v1508, %v1659
      %v1710 = vadd.f32 %v1509, %v1599
      %v1711 = vadd.f32 %v1510, %v1662
      %v1712 = vadd.f32 %v1511, %v1601
      %v1713 = vadd.f32 %v1512, %v1664
      %v1714 = vadd.f32 %v1513, %v1604
      %v1715 = vadd.f32 %v1514, %v1667
      %v1716 = vadd.f32 %v1515, %v1606
      %v1717 = vadd.f32 %v1516, %v1669
      %v1718 = vadd.f32 %v1517, %v1609
      %v1719 = vadd.f32 %v1518, %v1672
      %v1720 = vadd.f32 %v1519, %v1611
      %v1721 = vadd.f32 %v1520, %v1674
      %v1722 = vadd.f32 %v1521, %v1614
      %v1723 = vadd.f32 %v1522, %v1677
      %v1724 = vadd.f32 %v1523, %v1616
      %v1725 = vadd.f32 %v1524, %v1679
      %v1726 = vadd.f32 %v1525, %v1619
      %v1727 = vadd.f32 %v1526, %v1682
      %v1728 = vadd.f32 %v1527, %v1621
      %v1729 = vadd.f32 %v1528, %v1684
      %v1730 = vadd.f32 %v1529, %v1624
      %v1731 = vadd.f32 %v1530, %v1687
      %1732 = vst [vmem:[%s147] sm:$0xff] %v1690
      %1733 = vst.msk [vmem:[%s147 + $0x8] sm:$0xff] %vm1276, %v1691
      %1734 = vst [vmem:[%s147 + $0x10] sm:$0xff] %v1692
      %1735 = vst.msk [vmem:[%s147 + $0x18] sm:$0xff] %vm1276, %v1693
      %1736 = vst [vmem:[%s147 + $0x20] sm:$0xff] %v1694
      %1737 = vst.msk [vmem:[%s147 + $0x28] sm:$0xff] %vm1276, %v1695
      %1738 = vst [vmem:[%s147 + $0x30] sm:$0xff] %v1696
      %1739 = vst.msk [vmem:[%s147 + $0x38] sm:$0xff] %vm1276, %v1697
      %1740 = vst [vmem:[%s147 + $0x40] sm:$0xff] %v1698
      %1741 = vst.msk [vmem:[%s147 + $0x48] sm:$0xff] %vm1276, %v1699
      %1742 = vst [vmem:[%s147 + $0x50] sm:$0xff] %v1700
      %1743 = vst.msk [vmem:[%s147 + $0x58] sm:$0xff] %vm1276, %v1701
      %1744 = vst [vmem:[%s147 + $0x60] sm:$0xff] %v1702
      %1745 = vst.msk [vmem:[%s147 + $0x68] sm:$0xff] %vm1276, %v1703
      %1746 = vst [vmem:[%s147 + $0x70] sm:$0xff] %v1704
      %1747 = vst.msk [vmem:[%s147 + $0x78] sm:$0xff] %vm1276, %v1705
      %1748 = vst [vmem:[%s147 + $0x80] sm:$0xff] %v1706
      %1749 = vst.msk [vmem:[%s147 + $0x88] sm:$0xff] %vm1276, %v1707
      %1750 = vst [vmem:[%s147 + $0x90] sm:$0xff] %v1708
      %1751 = vst.msk [vmem:[%s147 + $0x98] sm:$0xff] %vm1276, %v1709
      %1752 = vst [vmem:[%s147 + $0xa0] sm:$0xff] %v1710
      %1753 = vst.msk [vmem:[%s147 + $0xa8] sm:$0xff] %vm1276, %v1711
      %1754 = vst [vmem:[%s147 + $0xb0] sm:$0xff] %v1712
      %1755 = vst.msk [vmem:[%s147 + $0xb8] sm:$0xff] %vm1276, %v1713
      %1756 = vst [vmem:[%s147 + $0xc0] sm:$0xff] %v1714
      %1757 = vst.msk [vmem:[%s147 + $0xc8] sm:$0xff] %vm1276, %v1715
      %1758 = vst [vmem:[%s147 + $0xd0] sm:$0xff] %v1716
      %1759 = vst.msk [vmem:[%s147 + $0xd8] sm:$0xff] %vm1276, %v1717
      %1760 = vst [vmem:[%s147 + $0xe0] sm:$0xff] %v1718
      %1761 = vst.msk [vmem:[%s147 + $0xe8] sm:$0xff] %vm1276, %v1719
      %1762 = vst [vmem:[%s147 + $0xf0] sm:$0xff] %v1720
      %1763 = vst.msk [vmem:[%s147 + $0xf8] sm:$0xff] %vm1276, %v1721
      %1764 = vst [vmem:[%s147 + $0x100] sm:$0xff] %v1722
      %1765 = vst.msk [vmem:[%s147 + $0x108] sm:$0xff] %vm1276, %v1723
      %1766 = vst [vmem:[%s147 + $0x110] sm:$0xff] %v1724
      %1767 = vst.msk [vmem:[%s147 + $0x118] sm:$0xff] %vm1276, %v1725
      %1768 = vst [vmem:[%s147 + $0x120] sm:$0xff] %v1726
      %1769 = vst.msk [vmem:[%s147 + $0x128] sm:$0xff] %vm1276, %v1727
      %1770 = vst [vmem:[%s147 + $0x130] sm:$0xff] %v1728
      %1771 = vst.msk [vmem:[%s147 + $0x138] sm:$0xff] %vm1276, %v1729
      %1772 = vst [vmem:[%s147 + $0x140] sm:$0xff] %v1730
      %1773 = vst.msk [vmem:[%s147 + $0x148] sm:$0xff] %vm1276, %v1731
      // Predicated region
      $region29: #{extract_patches_style_gram.1} parent=23 // pred_check
        %p1774 = pneg %p149
      $region30: #{extract_patches_style_gram.1} parent=23 // pred_check_branch
        %1776 = sbr.rel (%p1774) target = $region32
      $region31: #{extract_patches_style_gram.1} parent=23 // pred_region
        %v1777 = vld [vmem:[%s147] sm:$0xff]
        %v1778 = vld [vmem:[%s147 + $0x8] sm:$0xff]
        %v1779 = vld [vmem:[%s147 + $0x10] sm:$0xff]
        %v1780 = vld [vmem:[%s147 + $0x18] sm:$0xff]
        %v1781 = vld [vmem:[%s147 + $0x20] sm:$0xff]
        %v1782 = vld [vmem:[%s147 + $0x28] sm:$0xff]
        %v1783 = vld [vmem:[%s147 + $0x30] sm:$0xff]
        %v1784 = vld [vmem:[%s147 + $0x38] sm:$0xff]
        %v1785 = vld [vmem:[%s147 + $0x40] sm:$0xff]
        %v1786 = vld [vmem:[%s147 + $0x48] sm:$0xff]
        %v1787 = vld [vmem:[%s147 + $0x50] sm:$0xff]
        %v1788 = vld [vmem:[%s147 + $0x58] sm:$0xff]
        %v1789 = vld [vmem:[%s147 + $0x60] sm:$0xff]
        %v1790 = vld [vmem:[%s147 + $0x68] sm:$0xff]
        %v1791 = vld [vmem:[%s147 + $0x70] sm:$0xff]
        %v1792 = vld [vmem:[%s147 + $0x78] sm:$0xff]
        %v1793 = vld [vmem:[%s147 + $0x80] sm:$0xff]
        %v1794 = vld [vmem:[%s147 + $0x88] sm:$0xff]
        %v1795 = vld [vmem:[%s147 + $0x90] sm:$0xff]
        %v1796 = vld [vmem:[%s147 + $0x98] sm:$0xff]
        %v1797 = vld [vmem:[%s147 + $0xa0] sm:$0xff]
        %v1798 = vld [vmem:[%s147 + $0xa8] sm:$0xff]
        %v1799 = vld [vmem:[%s147 + $0xb0] sm:$0xff]
        %v1800 = vld [vmem:[%s147 + $0xb8] sm:$0xff]
        %v1801 = vld [vmem:[%s147 + $0xc0] sm:$0xff]
        %v1802 = vld [vmem:[%s147 + $0xc8] sm:$0xff]
        %v1803 = vld [vmem:[%s147 + $0xd0] sm:$0xff]
        %v1804 = vld [vmem:[%s147 + $0xd8] sm:$0xff]
        %v1805 = vld [vmem:[%s147 + $0xe0] sm:$0xff]
        %v1806 = vld [vmem:[%s147 + $0xe8] sm:$0xff]
        %v1807 = vld [vmem:[%s147 + $0xf0] sm:$0xff]
        %v1808 = vld [vmem:[%s147 + $0xf8] sm:$0xff]
        %v1809 = vld [vmem:[%s147 + $0x100] sm:$0xff]
        %v1810 = vld [vmem:[%s147 + $0x108] sm:$0xff]
        %v1811 = vld [vmem:[%s147 + $0x110] sm:$0xff]
        %v1812 = vld [vmem:[%s147 + $0x118] sm:$0xff]
        %v1813 = vld [vmem:[%s147 + $0x120] sm:$0xff]
        %v1814 = vld [vmem:[%s147 + $0x128] sm:$0xff]
        %v1815 = vld [vmem:[%s147 + $0x130] sm:$0xff]
        %v1816 = vld [vmem:[%s147 + $0x138] sm:$0xff]
        %v1817 = vld [vmem:[%s147 + $0x140] sm:$0xff]
        %v1818 = vld [vmem:[%s147 + $0x148] sm:$0xff]
        %v1819 = vmul.f32 %v1777, 6.802721e-05
        %v1820 = vmul.f32 %v1778, 6.802721e-05
        %v1821 = vmul.f32 %v1779, 6.802721e-05
        %v1822 = vmul.f32 %v1780, 6.802721e-05
        %v1823 = vmul.f32 %v1781, 6.802721e-05
        %v1824 = vmul.f32 %v1782, 6.802721e-05
        %v1825 = vmul.f32 %v1783, 6.802721e-05
        %v1826 = vmul.f32 %v1784, 6.802721e-05
        %v1827 = vmul.f32 %v1785, 6.802721e-05
        %v1828 = vmul.f32 %v1786, 6.802721e-05
        %v1829 = vmul.f32 %v1787, 6.802721e-05
        %v1830 = vmul.f32 %v1788, 6.802721e-05
        %v1831 = vmul.f32 %v1789, 6.802721e-05
        %v1832 = vmul.f32 %v1790, 6.802721e-05
        %v1833 = vmul.f32 %v1791, 6.802721e-05
        %v1834 = vmul.f32 %v1792, 6.802721e-05
        %v1835 = vmul.f32 %v1793, 6.802721e-05
        %v1836 = vmul.f32 %v1794, 6.802721e-05
        %v1837 = vmul.f32 %v1795, 6.802721e-05
        %v1838 = vmul.f32 %v1796, 6.802721e-05
        %v1839 = vmul.f32 %v1797, 6.802721e-05
        %v1840 = vmul.f32 %v1798, 6.802721e-05
        %v1841 = vmul.f32 %v1799, 6.802721e-05
        %v1842 = vmul.f32 %v1800, 6.802721e-05
        %v1843 = vmul.f32 %v1801, 6.802721e-05
        %v1844 = vmul.f32 %v1802, 6.802721e-05
        %v1845 = vmul.f32 %v1803, 6.802721e-05
        %v1846 = vmul.f32 %v1804, 6.802721e-05
        %v1847 = vmul.f32 %v1805, 6.802721e-05
        %v1848 = vmul.f32 %v1806, 6.802721e-05
        %v1849 = vmul.f32 %v1807, 6.802721e-05
        %v1850 = vmul.f32 %v1808, 6.802721e-05
        %v1851 = vmul.f32 %v1809, 6.802721e-05
        %v1852 = vmul.f32 %v1810, 6.802721e-05
        %v1853 = vmul.f32 %v1811, 6.802721e-05
        %v1854 = vmul.f32 %v1812, 6.802721e-05
        %v1855 = vmul.f32 %v1813, 6.802721e-05
        %v1856 = vmul.f32 %v1814, 6.802721e-05
        %v1857 = vmul.f32 %v1815, 6.802721e-05
        %v1858 = vmul.f32 %v1816, 6.802721e-05
        %v1859 = vmul.f32 %v1817, 6.802721e-05
        %v1860 = vmul.f32 %v1818, 6.802721e-05
        %1861 = vst [vmem:[%s147] sm:$0xff] %v1819
        %1862 = vst.msk [vmem:[%s147 + $0x8] sm:$0xff] %vm1276, %v1820
        %1863 = vst [vmem:[%s147 + $0x10] sm:$0xff] %v1821
        %1864 = vst.msk [vmem:[%s147 + $0x18] sm:$0xff] %vm1276, %v1822
        %1865 = vst [vmem:[%s147 + $0x20] sm:$0xff] %v1823
        %1866 = vst.msk [vmem:[%s147 + $0x28] sm:$0xff] %vm1276, %v1824
        %1867 = vst [vmem:[%s147 + $0x30] sm:$0xff] %v1825
        %1868 = vst.msk [vmem:[%s147 + $0x38] sm:$0xff] %vm1276, %v1826
        %1869 = vst [vmem:[%s147 + $0x40] sm:$0xff] %v1827
        %1870 = vst.msk [vmem:[%s147 + $0x48] sm:$0xff] %vm1276, %v1828
        %1871 = vst [vmem:[%s147 + $0x50] sm:$0xff] %v1829
        %1872 = vst.msk [vmem:[%s147 + $0x58] sm:$0xff] %vm1276, %v1830
        %1873 = vst [vmem:[%s147 + $0x60] sm:$0xff] %v1831
        %1874 = vst.msk [vmem:[%s147 + $0x68] sm:$0xff] %vm1276, %v1832
        %1875 = vst [vmem:[%s147 + $0x70] sm:$0xff] %v1833
        %1876 = vst.msk [vmem:[%s147 + $0x78] sm:$0xff] %vm1276, %v1834
        %1877 = vst [vmem:[%s147 + $0x80] sm:$0xff] %v1835
        %1878 = vst.msk [vmem:[%s147 + $0x88] sm:$0xff] %vm1276, %v1836
        %1879 = vst [vmem:[%s147 + $0x90] sm:$0xff] %v1837
        %1880 = vst.msk [vmem:[%s147 + $0x98] sm:$0xff] %vm1276, %v1838
        %1881 = vst [vmem:[%s147 + $0xa0] sm:$0xff] %v1839
        %1882 = vst.msk [vmem:[%s147 + $0xa8] sm:$0xff] %vm1276, %v1840
        %1883 = vst [vmem:[%s147 + $0xb0] sm:$0xff] %v1841
        %1884 = vst.msk [vmem:[%s147 + $0xb8] sm:$0xff] %vm1276, %v1842
        %1885 = vst [vmem:[%s147 + $0xc0] sm:$0xff] %v1843
        %1886 = vst.msk [vmem:[%s147 + $0xc8] sm:$0xff] %vm1276, %v1844
        %1887 = vst [vmem:[%s147 + $0xd0] sm:$0xff] %v1845
        %1888 = vst.msk [vmem:[%s147 + $0xd8] sm:$0xff] %vm1276, %v1846
        %1889 = vst [vmem:[%s147 + $0xe0] sm:$0xff] %v1847
        %1890 = vst.msk [vmem:[%s147 + $0xe8] sm:$0xff] %vm1276, %v1848
        %1891 = vst [vmem:[%s147 + $0xf0] sm:$0xff] %v1849
        %1892 = vst.msk [vmem:[%s147 + $0xf8] sm:$0xff] %vm1276, %v1850
        %1893 = vst [vmem:[%s147 + $0x100] sm:$0xff] %v1851
        %1894 = vst.msk [vmem:[%s147 + $0x108] sm:$0xff] %vm1276, %v1852
        %1895 = vst [vmem:[%s147 + $0x110] sm:$0xff] %v1853
        %1896 = vst.msk [vmem:[%s147 + $0x118] sm:$0xff] %vm1276, %v1854
        %1897 = vst [vmem:[%s147 + $0x120] sm:$0xff] %v1855
        %1898 = vst.msk [vmem:[%s147 + $0x128] sm:$0xff] %vm1276, %v1856
        %1899 = vst [vmem:[%s147 + $0x130] sm:$0xff] %v1857
        %1900 = vst.msk [vmem:[%s147 + $0x138] sm:$0xff] %vm1276, %v1858
        %1901 = vst [vmem:[%s147 + $0x140] sm:$0xff] %v1859
        %1902 = vst.msk [vmem:[%s147 + $0x148] sm:$0xff] %vm1276, %v1860
      $region32: #{extract_patches_style_gram.1} parent=23 // pred_fallthru
        _
      %p1903 = scmp.lt.s32.totalorder %s16, 1
      %s1904 = scalar_select %p1903, %s16, 1
      %s1905 = smul.addr %s1904, 42
      %s1906 = smul.addr %s1905, 8
      %s1907 = scalar_lea.vmem %s1, %s1906
      // Predicated region
      $region33: #{extract_patches_style_gram.1} parent=23 // pred_check
        %p1908 = pneg %p70
      $region34: #{extract_patches_style_gram.1} parent=23 // pred_check_branch
        %1910 = sbr.rel (%p1908) target = $region36
      $region35: #{extract_patches_style_gram.1} parent=23 // pred_region
        _
      $region36: #{extract_patches_style_gram.1} parent=23 // pred_fallthru
        _
    $region24: #{extract_patches_style_gram.1} parent=5 // pred_fallthru
      _
    %p1911 = scmp.le.s32.totalorder 2, %s7
    // Predicated region
    $region37: #{extract_patches_style_gram.1} parent=5 // pred_check
      %p1912 = pneg %p1911
    $region38: #{extract_patches_style_gram.1} parent=5 // pred_check_branch
      %1914 = sbr.rel (%p1912) target = $region40
    $region39: #{extract_patches_style_gram.1} parent=5 // pred_region
      %s1915 = ssub.s32 %s7, 2
      // Predicated region
      $region41: #{extract_patches_style_gram.1} parent=39 // pred_check
        %p1916 = pneg %p76
      $region42: #{extract_patches_style_gram.1} parent=39 // pred_check_branch
        %1918 = sbr.rel (%p1916) target = $region44
      $region43: #{extract_patches_style_gram.1} parent=39 // pred_region
        %p1919 = scmp.lt.s32.totalorder %s18, 1
        %s1920 = scalar_select %p1919, %s18, 1
        %s1921 = smul.addr %s1920, 42
        %s1922 = smul.addr %s1921, 8
        %s1923 = scalar_lea.vmem %s1, %s1922
      $region44: #{extract_patches_style_gram.1} parent=39 // pred_fallthru
        _
    $region40: #{extract_patches_style_gram.1} parent=5 // pred_fallthru
      _
  $region6: #{extract_patches_style_gram.1} parent=0 // loop_footer
    %s11 = sadd.s32 1, %s7
  $region7: #{extract_patches_style_gram.1} parent=0 // loop_footer_branch
    %6 = sbr.rel target = $region3
  $region8: #{extract_patches_style_gram.1} parent=0 // loop_exit
    _

</llo_original>
